<compile_context>
chip_gen: v7x
topology: tpu7x:2x2x1
jax: 0.10.0
libtpu: 0.0.40
codegen_flags: <defaults>
</compile_context>

<pallas_src>
import jax
import jax.numpy as jnp
from jax import lax
from jax.experimental import pallas as pl
from jax.experimental.pallas import tpu as pltpu


def _round_up(x, m):
    return ((x + m - 1) // m) * m


def _silu(x):
    # SiLU = x * sigmoid(x) = x * 0.5 * (1 + tanh(x/2)).
    # A single tanh EUP push per element (vs. exp + reciprocal = 2 pushes).
    return x * (0.5 * (1.0 + jnp.tanh(0.5 * x)))


# --------------------------------------------------------------------------------------
# Kernel 1: mlp_in + fused projections + pos-linear, gridded over node blocks.
# --------------------------------------------------------------------------------------
def proj_kernel(x_ref, pos_ref, w_in_ref, w3_ref, wp1_ref, b_in_ref,
                src_ref, dst_ref):
    c = wp1_ref.shape[1]                      # padded (lane-dense) feature width

    x = x_ref[...]                            # (TN, Cin_p)

    # mlp_in: Linear (BN(eval) pre-folded into w_in / b_in on the host) -> SiLU
    h = jnp.dot(x, w_in_ref[...], preferred_element_type=jnp.float32) + b_in_ref[0:1, :]
    h = _silu(h)

    # Fused projections: ONE MXU pass for [lin | lin_src | lin_dst]  -> (TN, 3C)
    hw = jnp.dot(h, w3_ref[...], preferred_element_type=jnp.float32)
    v     = hw[:, 0 * c:1 * c]
    a_src = hw[:, 1 * c:2 * c]
    a_dst = hw[:, 2 * c:3 * c]

    # pos_nn first linear (K=3): 3 VPU FMAs instead of a drain-dominated MXU pass.
    pos = pos_ref[...]                        # (TN, 3)
    wp1 = wp1_ref[...]                        # (3, C)
    p1 = (pos[:, 0:1] * wp1[0:1, :]
          + pos[:, 1:2] * wp1[1:2, :]
          + pos[:, 2:3] * wp1[2:3, :])        # (TN, C)

    # Lane-dense packed outputs (all 128-aligned slices -> unmasked full-tile stores).
    src_ref[:, 0 * c:1 * c] = v
    src_ref[:, 1 * c:2 * c] = a_src
    src_ref[:, 2 * c:3 * c] = p1
    dst_ref[:, 0 * c:1 * c] = a_dst
    dst_ref[:, 1 * c:2 * c] = p1


# --------------------------------------------------------------------------------------
# Kernel 2: flash-style PointTransformerConv + fused mlp_out epilogue.
# Grid = (target blocks i [parallel], source blocks j [arbitrary / reduction]).
# --------------------------------------------------------------------------------------
def attn_kernel(cnt_ref,                      # scalar prefetch: (nI*nJ,) int32 in SMEM
                dst_ref, src_ref, mask_ref, w4_ref, pack2_ref,
                o_ref,
                m_sc, l_sc, acc_sc):
    i = pl.program_id(0)
    j = pl.program_id(1)
    n_j = pl.num_programs(1)
    c = o_ref.shape[1]
    ti = dst_ref.shape[0]
    tj = src_ref.shape[0]

    @pl.when(j == 0)
    def _init():
        m_sc[...] = jnp.full_like(m_sc, -jnp.inf)
        l_sc[...] = jnp.zeros_like(l_sc)
        acc_sc[...] = jnp.zeros_like(acc_sc)

    # Skip (Ti, Tj) blocks containing no edges (block occupancy via scalar prefetch).
    @pl.when(cnt_ref[i * n_j + j] > 0)
    def _block():
        dst = dst_ref[...]                    # (TI, 2C): [a_dst | p1_i]
        src = src_ref[...]                    # (TJ, 3C): [v | a_src | p1_j]
        a_dst_i = dst[:, 0 * c:1 * c]
        p1_i    = dst[:, 1 * c:2 * c]
        v_j     = src[:, 0 * c:1 * c]
        a_src_j = src[:, 1 * c:2 * c]
        p1_j    = src[:, 2 * c:3 * c]

        bp1 = pack2_ref[0:1, :]
        bp2 = pack2_ref[1:2, :]
        ba1 = pack2_ref[2:3, :]
        ba2 = pack2_ref[3:4, :]

        # pos_nn layer 2 and attn_nn as single 2-D MXU matmuls over (TI*TJ, C).
        d1 = _silu(p1_i[:, None, :] - p1_j[None, :, :] + bp1)            # (TI,TJ,C)
        delta = _silu(
            jnp.dot(d1.reshape(ti * tj, c), w4_ref[:, 0 * c:1 * c],
                    preferred_element_type=jnp.float32) + bp2
        ).reshape(ti, tj, c)

        al = (a_dst_i[:, None, :] - a_src_j[None, :, :] + delta).reshape(ti * tj, c)
        al = _silu(jnp.dot(al, w4_ref[:, 1 * c:2 * c],
                           preferred_element_type=jnp.float32) + ba1)
        al = _silu(jnp.dot(al, w4_ref[:, 2 * c:3 * c],
                           preferred_element_type=jnp.float32) + ba2)
        logits = al.reshape(ti, tj, c)

        msk = (mask_ref[...] > 0.5)[:, :, None]                          # (TI,TJ,1)
        logits = jnp.where(msk, logits, jnp.float32(-1e30))

        # Online (flash-style) per-channel softmax over the source axis.
        m_blk = jnp.max(logits, axis=1)                                  # (TI, C)
        m_new = jnp.maximum(m_sc[...], m_blk)
        alpha = jnp.exp(m_sc[...] - m_new)                               # (TI, C)
        p = jnp.where(msk, jnp.exp(logits - m_new[:, None, :]), 0.0)     # (TI,TJ,C)
        l_sc[...] = alpha * l_sc[...] + jnp.sum(p, axis=1)
        acc_sc[...] = alpha * acc_sc[...] + jnp.sum(p * (v_j[None, :, :] + delta), axis=1)
        m_sc[...] = m_new

    @pl.when(j == n_j - 1)
    def _finalize():
        # Guarded denominator, EUP approx reciprocal.
        inv_l = pl.reciprocal(jnp.maximum(l_sc[...], 1e-30), approx=True)
        agg = acc_sc[...] * inv_l                                        # (TI, C)
        # Fused mlp_out: Linear (BN(eval) pre-folded into w_out / b_out on the host).
        out = jnp.dot(agg, w4_ref[:, 3 * c:4 * c],
                      preferred_element_type=jnp.float32) + pack2_ref[4:5, :]
        o_ref[...] = out.astype(o_ref.dtype)


# --------------------------------------------------------------------------------------
# Wrapper: BN folding, padding / packing glue + the two pallas_calls.
# --------------------------------------------------------------------------------------
def transformer_block(x, pos, edge_index, params, *, ti=32, tj=128, tn=128, lane=128):
    n, c_in = x.shape
    c_out = params['w_lin'].shape[1]
    eps = 1e-5

    cin_p = _round_up(c_in, lane)
    c_p = _round_up(c_out, lane)
    n_p = _round_up(n, max(tj, tn))
    assert n_p % ti == 0 and n_p % tj == 0 and n_p % tn == 0

    # ---- pad node inputs (padded nodes are zero; sliced off at the end) ----
    x_p = jnp.zeros((n_p, cin_p), jnp.float32).at[:n, :c_in].set(x.astype(jnp.float32))
    pos_p = jnp.zeros((n_p, 3), jnp.float32).at[:n, :].set(pos.astype(jnp.float32))

    # ---- densify edge_index into a (target, source) mask.
    # remove_self_loops + add_self_loops in PointTransformerConv => diagonal forced on.
    # (Diagonal is also set for padded rows so every softmax denominator stays finite;
    #  those rows are discarded.)
    # TODO(synk): dense O(N^2) mask; fine at these sizes, switch to CSR block lists for
    #             very large graphs.
    src_idx, tgt_idx = edge_index[0], edge_index[1]
    mask = jnp.zeros((n_p, n_p), jnp.float32)
    mask = mask.at[tgt_idx, src_idx].set(1.0)
    diag = jnp.arange(n_p)
    mask = mask.at[diag, diag].set(1.0)

    n_i, n_j = n_p // ti, n_p // tj
    blk_cnt = (mask.reshape(n_i, ti, n_j, tj).sum(axis=(1, 3)) > 0).astype(
        jnp.int32).reshape(-1)                                   # (n_i*n_j,) occupancy

    # ---- fold BatchNorm(eval) affine into the adjacent Linear (exact affine fold) ----
    def bn_fold(w, b, bn):
        gamma, beta, rm, rv = bn[0], bn[1], bn[2], bn[3]
        s = gamma * lax.rsqrt(rv + eps)                          # (C,)
        w_f = w.astype(jnp.float32) * s[None, :]
        b_f = (b.astype(jnp.float32) - rm[None, :]) * s[None, :] + beta[None, :]
        return w_f, b_f

    w_in_f, b_in_f = bn_fold(params['w_in'], params['b_in'], params['bn_in'])
    w_out_f, b_out_f = bn_fold(params['w_out'], params['b_out'], params['bn_out'])

    # ---- pack / zero-pad parameters (one DMA per packed array) ----
    def pad2(a, r, c):
        a = a.astype(jnp.float32)
        return jnp.pad(a, ((0, r - a.shape[0]), (0, c - a.shape[1])))

    w_in = pad2(w_in_f, cin_p, cin_p)
    b_in = pad2(b_in_f, 1, cin_p)                                # (1, cin_p)
    w3 = jnp.concatenate([pad2(params['w_lin'], cin_p, c_p),     # (cin_p, 3*c_p)
                          pad2(params['w_src'], cin_p, c_p),
                          pad2(params['w_dst'], cin_p, c_p)], axis=1)
    wp1 = pad2(params['wp1'], 3, c_p)
    w4 = jnp.concatenate([pad2(params['wp2'], c_p, c_p),         # (c_p, 4*c_p)
                          pad2(params['wa1'], c_p, c_p),
                          pad2(params['wa2'], c_p, c_p),
                          pad2(w_out_f, c_p, c_p)], axis=1)
    pack2 = jnp.concatenate([                                    # (5, c_p)
        pad2(params['bp1'], 1, c_p),
        pad2(params['bp2'], 1, c_p),
        pad2(params['ba1'], 1, c_p),
        pad2(params['ba2'], 1, c_p),
        pad2(b_out_f, 1, c_p),
    ], axis=0)

    # ---- kernel 1: per-node-block projections ----
    n_n = n_p // tn
    src_feats, dst_feats = pl.pallas_call(
        proj_kernel,
        out_shape=(jax.ShapeDtypeStruct((n_p, 3 * c_p), jnp.float32),
                   jax.ShapeDtypeStruct((n_p, 2 * c_p), jnp.float32)),
        grid=(n_n,),
        in_specs=[
            pl.BlockSpec((tn, cin_p), lambda b: (b, 0)),
            pl.BlockSpec((tn, 3), lambda b: (b, 0)),
            pl.BlockSpec((cin_p, cin_p), lambda b: (0, 0)),
            pl.BlockSpec((cin_p, 3 * c_p), lambda b: (0, 0)),
            pl.BlockSpec((3, c_p), lambda b: (0, 0)),
            pl.BlockSpec((1, cin_p), lambda b: (0, 0)),
        ],
        out_specs=[pl.BlockSpec((tn, 3 * c_p), lambda b: (b, 0)),
                   pl.BlockSpec((tn, 2 * c_p), lambda b: (b, 0))],
        compiler_params=pltpu.CompilerParams(dimension_semantics=("parallel",)),
    )(x_p, pos_p, w_in, w3, wp1, b_in)

    # ---- kernel 2: flash-style attention + mlp_out epilogue ----
    out_p = pl.pallas_call(
        attn_kernel,
        out_shape=jax.ShapeDtypeStruct((n_p, c_p), jnp.float32),
        grid_spec=pltpu.PrefetchScalarGridSpec(
            num_scalar_prefetch=1,
            grid=(n_i, n_j),
            in_specs=[
                pl.BlockSpec((ti, 2 * c_p), lambda i, j, cnt: (i, 0)),   # dst_feats
                pl.BlockSpec((tj, 3 * c_p), lambda i, j, cnt: (j, 0)),   # src_feats
                pl.BlockSpec((ti, tj),      lambda i, j, cnt: (i, j)),   # mask
                pl.BlockSpec((c_p, 4 * c_p), lambda i, j, cnt: (0, 0)),  # packed weights
                pl.BlockSpec((5, c_p),      lambda i, j, cnt: (0, 0)),   # packed biases
            ],
            out_specs=pl.BlockSpec((ti, c_p), lambda i, j, cnt: (i, 0)),
            scratch_shapes=[pltpu.VMEM((ti, c_p), jnp.float32)] * 3,     # m, l, acc
        ),
        compiler_params=pltpu.CompilerParams(
            dimension_semantics=("parallel", "arbitrary"),
            vmem_limit_bytes=48 * 1024 * 1024),
    )(blk_cnt, dst_feats, src_feats, mask, w4, pack2)

    return out_p[:n, :c_out]


if __name__ == "__main__":
    N, C_IN, C_OUT = 200, 8, 16
    key = jax.random.PRNGKey(0)
    keys = jax.random.split(key, 20)

    def dense(k, fan_in, fan_out):
        return jax.random.normal(k, (fan_in, fan_out), jnp.float32) / jnp.sqrt(
            jnp.float32(fan_in))

    def bias(k, c):
        return 0.1 * jax.random.normal(k, (1, c), jnp.float32)

    def bn_params(k, c):
        k1, k2, k3, k4 = jax.random.split(k, 4)
        gamma = 1.0 + 0.1 * jax.random.normal(k1, (c,), jnp.float32)
        beta = 0.1 * jax.random.normal(k2, (c,), jnp.float32)
        rm = 0.1 * jax.random.normal(k3, (c,), jnp.float32)
        rv = 1.0 + 0.5 * jax.random.uniform(k4, (c,), jnp.float32)
        return jnp.stack([gamma, beta, rm, rv], axis=0)          # (4, c)

    params = dict(
        w_in=dense(keys[0], C_IN, C_IN), b_in=bias(keys[1], C_IN), bn_in=bn_params(keys[2], C_IN),
        w_lin=dense(keys[3], C_IN, C_OUT),
        w_src=dense(keys[4], C_IN, C_OUT),
        w_dst=dense(keys[5], C_IN, C_OUT),
        wp1=dense(keys[6], 3, C_OUT), bp1=bias(keys[7], C_OUT),
        wp2=dense(keys[8], C_OUT, C_OUT), bp2=bias(keys[9], C_OUT),
        wa1=dense(keys[10], C_OUT, C_OUT), ba1=bias(keys[11], C_OUT),
        wa2=dense(keys[12], C_OUT, C_OUT), ba2=bias(keys[13], C_OUT),
        w_out=dense(keys[14], C_OUT, C_OUT), b_out=bias(keys[15], C_OUT),
        bn_out=bn_params(keys[16], C_OUT),
    )

    x = jax.random.normal(keys[17], (N, C_IN), jnp.float32)
    pos = jax.random.normal(keys[18], (N, 3), jnp.float32)

    # edge_index (2, E): row 0 = source j, row 1 = target i (PyG source_to_target flow).
    src = jnp.concatenate([(jnp.arange(N) + k) % N for k in (1, 3, 7)]).astype(jnp.int32)
    tgt = jnp.tile(jnp.arange(N), 3).astype(jnp.int32)
    edge_index = jnp.stack([src, tgt])                           # (2, 600)

    out = transformer_block(x, pos, edge_index, params)
    out = jax.block_until_ready(out)
    assert out.shape == (N, C_OUT) and out.dtype == jnp.float32
    assert bool(jnp.all(jnp.isfinite(out)))
    print("KERNEL_OK")
</pallas_src>

<mosaic_0001>
module attributes {stable_mosaic.version = 11 : i64} {
  func.func @proj_kernel(%arg0: i32, %arg1: memref<128x128xf32, #tpu.memory_space<vmem>>, %arg2: memref<128x3xf32, #tpu.memory_space<vmem>>, %arg3: memref<128x128xf32, #tpu.memory_space<vmem>>, %arg4: memref<128x384xf32, #tpu.memory_space<vmem>>, %arg5: memref<3x128xf32, #tpu.memory_space<vmem>>, %arg6: memref<1x128xf32, #tpu.memory_space<vmem>>, %arg7: memref<128x384xf32, #tpu.memory_space<vmem>>, %arg8: memref<128x256xf32, #tpu.memory_space<vmem>>) attributes {dimension_semantics = [#tpu.dimension_semantics<parallel>], iteration_bounds = array<i64: 2>, scalar_prefetch = 0 : i64, scratch_operands = 0 : i64, tpu.core_type = #tpu.core_type<tc>, window_params = [{transform_indices = @transform_0, window_bounds = array<i64: 128, 128>}, {transform_indices = @transform_1, window_bounds = array<i64: 128, 3>}, {pipeline_mode = #tpu.pipeline_mode<synchronous>, transform_indices = @transform_2, window_bounds = array<i64: 128, 128>}, {pipeline_mode = #tpu.pipeline_mode<synchronous>, transform_indices = @transform_3, window_bounds = array<i64: 128, 384>}, {pipeline_mode = #tpu.pipeline_mode<synchronous>, transform_indices = @transform_4, window_bounds = array<i64: 3, 128>}, {pipeline_mode = #tpu.pipeline_mode<synchronous>, transform_indices = @transform_5, window_bounds = array<i64: 1, 128>}, {transform_indices = @transform_6, window_bounds = array<i64: 128, 384>}, {transform_indices = @transform_7, window_bounds = array<i64: 128, 256>}]} {
    %c0 = arith.constant 0 : index
    %c0_0 = arith.constant 0 : index
    %0 = vector.load %arg1[%c0, %c0_0] : memref<128x128xf32, #tpu.memory_space<vmem>>, vector<128x128xf32>
    %c0_1 = arith.constant 0 : index
    %c0_2 = arith.constant 0 : index
    %1 = vector.load %arg3[%c0_1, %c0_2] : memref<128x128xf32, #tpu.memory_space<vmem>>, vector<128x128xf32>
    %cst = arith.constant dense<0.000000e+00> : vector<128x128xf32>
    %2 = tpu.matmul %0, %1, %cst {dimension_numbers = #tpu.dot_dimension_numbers<[1], [0], [0], [1], [0, 0, 1, 1], [], []>} : vector<128x128xf32>, vector<128x128xf32>, vector<128x128xf32> -> vector<128x128xf32>
    %c0_3 = arith.constant 0 : index
    %c0_4 = arith.constant 0 : index
    %3 = vector.load %arg6[%c0_3, %c0_4] : memref<1x128xf32, #tpu.memory_space<vmem>>, vector<1x128xf32>
    %4 = vector.broadcast %3 : vector<1x128xf32> to vector<128x128xf32>
    %5 = arith.addf %2, %4 : vector<128x128xf32>
    %cst_5 = arith.constant 5.000000e-01 : f32
    %6 = vector.broadcast %cst_5 : f32 to vector<128x128xf32>
    %7 = arith.mulf %6, %5 : vector<128x128xf32>
    %8 = math.tanh %7 : vector<128x128xf32>
    %cst_6 = arith.constant 1.000000e+00 : f32
    %9 = vector.broadcast %cst_6 : f32 to vector<128x128xf32>
    %10 = arith.addf %9, %8 : vector<128x128xf32>
    %cst_7 = arith.constant 5.000000e-01 : f32
    %11 = vector.broadcast %cst_7 : f32 to vector<128x128xf32>
    %12 = arith.mulf %11, %10 : vector<128x128xf32>
    %13 = arith.mulf %5, %12 : vector<128x128xf32>
    %c0_8 = arith.constant 0 : index
    %c0_9 = arith.constant 0 : index
    %14 = vector.load %arg4[%c0_8, %c0_9] : memref<128x384xf32, #tpu.memory_space<vmem>>, vector<128x384xf32>
    %cst_10 = arith.constant dense<0.000000e+00> : vector<128x384xf32>
    %15 = tpu.matmul %13, %14, %cst_10 {dimension_numbers = #tpu.dot_dimension_numbers<[1], [0], [0], [1], [0, 0, 1, 1], [], []>} : vector<128x128xf32>, vector<128x384xf32>, vector<128x384xf32> -> vector<128x384xf32>
    %16 = vector.extract_strided_slice %15 {offsets = [0, 0], sizes = [128, 128], strides = [1, 1]} : vector<128x384xf32> to vector<128x128xf32>
    %17 = vector.extract_strided_slice %15 {offsets = [0, 128], sizes = [128, 128], strides = [1, 1]} : vector<128x384xf32> to vector<128x128xf32>
    %18 = vector.extract_strided_slice %15 {offsets = [0, 256], sizes = [128, 128], strides = [1, 1]} : vector<128x384xf32> to vector<128x128xf32>
    %c0_11 = arith.constant 0 : index
    %c0_12 = arith.constant 0 : index
    %19 = vector.load %arg2[%c0_11, %c0_12] : memref<128x3xf32, #tpu.memory_space<vmem>>, vector<128x3xf32>
    %c0_13 = arith.constant 0 : index
    %c0_14 = arith.constant 0 : index
    %20 = vector.load %arg5[%c0_13, %c0_14] : memref<3x128xf32, #tpu.memory_space<vmem>>, vector<3x128xf32>
    %21 = vector.extract_strided_slice %19 {offsets = [0, 0], sizes = [128, 1], strides = [1, 1]} : vector<128x3xf32> to vector<128x1xf32>
    %22 = vector.extract_strided_slice %20 {offsets = [0, 0], sizes = [1, 128], strides = [1, 1]} : vector<3x128xf32> to vector<1x128xf32>
    %23 = vector.broadcast %21 : vector<128x1xf32> to vector<128x128xf32>
    %24 = vector.broadcast %22 : vector<1x128xf32> to vector<128x128xf32>
    %25 = arith.mulf %23, %24 : vector<128x128xf32>
    %26 = vector.extract_strided_slice %19 {offsets = [0, 1], sizes = [128, 1], strides = [1, 1]} : vector<128x3xf32> to vector<128x1xf32>
    %27 = vector.extract_strided_slice %20 {offsets = [1, 0], sizes = [1, 128], strides = [1, 1]} : vector<3x128xf32> to vector<1x128xf32>
    %28 = vector.broadcast %26 : vector<128x1xf32> to vector<128x128xf32>
    %29 = vector.broadcast %27 : vector<1x128xf32> to vector<128x128xf32>
    %30 = arith.mulf %28, %29 : vector<128x128xf32>
    %31 = arith.addf %25, %30 : vector<128x128xf32>
    %32 = vector.extract_strided_slice %19 {offsets = [0, 2], sizes = [128, 1], strides = [1, 1]} : vector<128x3xf32> to vector<128x1xf32>
    %33 = vector.extract_strided_slice %20 {offsets = [2, 0], sizes = [1, 128], strides = [1, 1]} : vector<3x128xf32> to vector<1x128xf32>
    %34 = vector.broadcast %32 : vector<128x1xf32> to vector<128x128xf32>
    %35 = vector.broadcast %33 : vector<1x128xf32> to vector<128x128xf32>
    %36 = arith.mulf %34, %35 : vector<128x128xf32>
    %37 = arith.addf %31, %36 : vector<128x128xf32>
    %c0_15 = arith.constant 0 : index
    %c0_16 = arith.constant 0 : index
    %38 = vector.load %arg7[%c0_15, %c0_16] : memref<128x384xf32, #tpu.memory_space<vmem>>, vector<128x128xf32>
    tpu.vector_store %arg7[%c0_15, %c0_16], %16 {strides = array<i32>} : memref<128x384xf32, #tpu.memory_space<vmem>>, vector<128x128xf32>,
    %c0_17 = arith.constant 0 : index
    %c128 = arith.constant 128 : index
    %39 = vector.load %arg7[%c0_17, %c128] : memref<128x384xf32, #tpu.memory_space<vmem>>, vector<128x128xf32>
    tpu.vector_store %arg7[%c0_17, %c128], %17 {strides = array<i32>} : memref<128x384xf32, #tpu.memory_space<vmem>>, vector<128x128xf32>,
    %c0_18 = arith.constant 0 : index
    %c256 = arith.constant 256 : index
    %40 = vector.load %arg7[%c0_18, %c256] : memref<128x384xf32, #tpu.memory_space<vmem>>, vector<128x128xf32>
    tpu.vector_store %arg7[%c0_18, %c256], %37 {strides = array<i32>} : memref<128x384xf32, #tpu.memory_space<vmem>>, vector<128x128xf32>,
    %c0_19 = arith.constant 0 : index
    %c0_20 = arith.constant 0 : index
    %41 = vector.load %arg8[%c0_19, %c0_20] : memref<128x256xf32, #tpu.memory_space<vmem>>, vector<128x128xf32>
    tpu.vector_store %arg8[%c0_19, %c0_20], %18 {strides = array<i32>} : memref<128x256xf32, #tpu.memory_space<vmem>>, vector<128x128xf32>,
    %c0_21 = arith.constant 0 : index
    %c128_22 = arith.constant 128 : index
    %42 = vector.load %arg8[%c0_21, %c128_22] : memref<128x256xf32, #tpu.memory_space<vmem>>, vector<128x128xf32>
    tpu.vector_store %arg8[%c0_21, %c128_22], %37 {strides = array<i32>} : memref<128x256xf32, #tpu.memory_space<vmem>>, vector<128x128xf32>,
    return
  }
  func.func @transform_0(%arg0: i32) -> (i32, i32) {
    %c0_i32 = arith.constant 0 : i32
    %c0_i32_0 = arith.constant 0 : i32
    return %arg0, %c0_i32 : i32, i32
  }
  func.func @transform_1(%arg0: i32) -> (i32, i32) {
    %c0_i32 = arith.constant 0 : i32
    %c0_i32_0 = arith.constant 0 : i32
    return %arg0, %c0_i32 : i32, i32
  }
  func.func @transform_2(%arg0: i32) -> (i32, i32) {
    %c0_i32 = arith.constant 0 : i32
    %c0_i32_0 = arith.constant 0 : i32
    %c0_i32_1 = arith.constant 0 : i32
    return %c0_i32, %c0_i32_0 : i32, i32
  }
  func.func @transform_3(%arg0: i32) -> (i32, i32) {
    %c0_i32 = arith.constant 0 : i32
    %c0_i32_0 = arith.constant 0 : i32
    %c0_i32_1 = arith.constant 0 : i32
    return %c0_i32, %c0_i32_0 : i32, i32
  }
  func.func @transform_4(%arg0: i32) -> (i32, i32) {
    %c0_i32 = arith.constant 0 : i32
    %c0_i32_0 = arith.constant 0 : i32
    %c0_i32_1 = arith.constant 0 : i32
    return %c0_i32, %c0_i32_0 : i32, i32
  }
  func.func @transform_5(%arg0: i32) -> (i32, i32) {
    %c0_i32 = arith.constant 0 : i32
    %c0_i32_0 = arith.constant 0 : i32
    %c0_i32_1 = arith.constant 0 : i32
    return %c0_i32, %c0_i32_0 : i32, i32
  }
  func.func @transform_6(%arg0: i32) -> (i32, i32) {
    %c0_i32 = arith.constant 0 : i32
    %c0_i32_0 = arith.constant 0 : i32
    return %arg0, %c0_i32 : i32, i32
  }
  func.func @transform_7(%arg0: i32) -> (i32, i32) {
    %c0_i32 = arith.constant 0 : i32
    %c0_i32_0 = arith.constant 0 : i32
    return %arg0, %c0_i32 : i32, i32
  }
}

</mosaic_0001>

<llo_original>
// kernel: tpu_custom_call.1
$region0: #{tpu_custom_call.1}
  #allocation0 [shape = 'u32[]', space=smem, size = 0x4, offset = 0x4, fixed_abs, tag = 'smem constant byte address 0x4 - core index']
  #allocation1 [shape = 'u32[144,128]{1,0:T(1,128)}', space=vmem, size = 0x12000, scoped, tag = 'internal scratch']
  %s0 = inlined_call_operand.vmem [shape: f32[256,128], index: 0, kind: input, shape index: {}]
  %s1 = inlined_call_operand.vmem [shape: f32[256,3], index: 1, kind: input, shape index: {}]
  %s2 = inlined_call_operand.hbm [shape: f32[128,128], index: 2, kind: input, shape index: {}]
  %s3 = inlined_call_operand.hbm [shape: f32[128,384], index: 3, kind: input, shape index: {}]
  %s4 = inlined_call_operand.vmem [shape: f32[3,128], index: 4, kind: input, shape index: {}]
  %s5 = inlined_call_operand.vmem [shape: f32[1,128], index: 5, kind: input, shape index: {}]
  %s6 = inlined_call_operand.hbm [shape: f32[256,384], index: 6, kind: output, shape index: {0}]
  %s7 = inlined_call_operand.hbm [shape: f32[256,256], index: 7, kind: output, shape index: {1}]
  %8 = xla_tuple %s6, %s7
  %s9 = sld [smem:[#allocation0]]
  $region73: #{tpu_custom_call.1} parent=0
    _
  %s11 = ssub.s32 1, %s9
  %s12 = scalar_select 0, %s11, %s9
  $region1: #{tpu_custom_call.1} parent=0
    #allocation2 [shape = 'u8[65536]{0}', space=vmem, size = 0x10000, scoped, tag = 'input window, operand 2, single buffered']
    #allocation3 [shape = 's32[2]{0}', space=sflag, size = 0x8, scoped, tag = 'scoped memory for tpu_custom_call.1']
    #allocation4 [shape = 's32[2]{0}', space=sflag, size = 0x8, scoped, tag = 'scoped memory for tpu_custom_call.1']
    #allocation5 [shape = 'u8[196608]{0}', space=vmem, size = 0x30000, scoped, tag = 'input window, operand 3, single buffered']
    #allocation6 [shape = 's32[1]{0}', space=sflag, size = 0x4, scoped, tag = 'scoped memory for tpu_custom_call.1']
    #allocation7 [shape = 'u8[393216]{0}', space=vmem, size = 0x60000, scoped, tag = 'output window, operand 0']
    #allocation8 [shape = 'u8[262144]{0}', space=vmem, size = 0x40000, scoped, tag = 'output window, operand 1']
    #allocation9 [shape = 's32[2]{0}', space=sflag, size = 0x8, scoped, tag = 'scoped memory for tpu_custom_call.1']
    %13 = vsyncpa [#allocation3], 0
    %14 = vsyncpa [#allocation6], 0
    %15 = vsyncpa [#allocation4], 0
    %s16 = scalar_lea.sflag [#allocation4], 1
    %17 = vsyncpa %s16, 0
    %18 = vsyncpa [#allocation9], 0
    %s19 = scalar_lea.sflag [#allocation9], 1
    %20 = vsyncpa %s19, 0
    loop: start=0, step=1, limit=4
    $region2: #{tpu_custom_call.1} parent=1 // loop_pre_header
      _
    $region3: #{tpu_custom_call.1} parent=1 // loop_header
      %s22 = sphi 0, %s26
      %p23 = scmp.ge.s32.totalorder %s22, 4
      %s32 = sphi 0, %s34
      %s35 = sphi 0, %s32
      %s36 = sphi 0, %s35
      %s52 = sphi 0, %s36
      %s58 = sphi 0, %s60
      %s61 = sphi 0, %s58
      %s62 = sphi 0, %s61
      %s78 = sphi 0, %s62
      %s82 = sphi 0, %s82
      %s84 = sphi 0, %s82
      %s85 = sphi 0, %s84
      %s99 = sphi 0, %s85
      %s103 = sphi 0, %s103
      %s105 = sphi 0, %s103
      %s106 = sphi 0, %s105
      %s120 = sphi 0, %s106
      %s124 = sphi 0, %s124
      %s126 = sphi 0, %s124
      %s127 = sphi 0, %s126
      %s141 = sphi 0, %s127
      %s145 = sphi 0, %s145
      %s147 = sphi 0, %s145
      %s148 = sphi 0, %s147
      %s162 = sphi 0, %s148
      %s168 = sphi 0, %s170
      %s171 = sphi 0, %s168
      %s172 = sphi 0, %s171
      %s188 = sphi 0, %s172
      %s194 = sphi 0, %s196
      %s197 = sphi 0, %s194
      %s198 = sphi 0, %s197
      %s214 = sphi 0, %s198
    $region4: #{tpu_custom_call.1} parent=1 // loop_header_branch
      %25 = sbr.rel (%p23) target = $region8
    $region5: #{tpu_custom_call.1} parent=1 // loop_body
      %s27 = ssub.s32 %s22, 1
      %s28 = ssub.s32 %s22, 2
      %s29 = sadd.s32 %s22, 1
      %s30 = ssub.s32 %s22, %s29
      %p31 = scmp.eq.s32.totalorder %s30, 0
      %s33 = sadd.s32 %s32, 1
      %s34 = scalar_select %p31, %s32, %s33
      %p37 = pneg %p31
      %p38 = scmp.eq.s32.totalorder %s22, 1
      %p39 = por %p37, %p38
      %p40 = scmp.ne.s32.totalorder %s32, %s35
      %p41 = scmp.eq.s32.totalorder %s22, 0
      %p42 = por %p40, %p41
      %p43 = scmp.ne.s32.totalorder %s32, %s35
      %p44 = scmp.eq.s32.totalorder %s27, 1
      %p45 = por %p43, %p44
      %p46 = scmp.ne.s32.totalorder %s35, %s36
      %p47 = scmp.eq.s32.totalorder %s27, 0
      %p48 = por %p46, %p47
      %p49 = scmp.ne.s32.totalorder %s35, %s36
      %p50 = scmp.eq.s32.totalorder %s28, 1
      %p51 = por %p49, %p50
      %p53 = scmp.ne.s32.totalorder %s36, %s52
      %p54 = scmp.eq.s32.totalorder %s28, 0
      %p55 = por %p53, %p54
      %s56 = ssub.s32 %s22, %s29
      %p57 = scmp.eq.s32.totalorder %s56, 0
      %s59 = sadd.s32 %s58, 1
      %s60 = scalar_select %p57, %s58, %s59
      %p63 = pneg %p57
      %p64 = scmp.eq.s32.totalorder %s22, 1
      %p65 = por %p63, %p64
      %p66 = scmp.ne.s32.totalorder %s58, %s61
      %p67 = scmp.eq.s32.totalorder %s22, 0
      %p68 = por %p66, %p67
      %p69 = scmp.ne.s32.totalorder %s58, %s61
      %p70 = scmp.eq.s32.totalorder %s27, 1
      %p71 = por %p69, %p70
      %p72 = scmp.ne.s32.totalorder %s61, %s62
      %p73 = scmp.eq.s32.totalorder %s27, 0
      %p74 = por %p72, %p73
      %p75 = scmp.ne.s32.totalorder %s61, %s62
      %p76 = scmp.eq.s32.totalorder %s28, 1
      %p77 = por %p75, %p76
      %p79 = scmp.ne.s32.totalorder %s62, %s78
      %p80 = scmp.eq.s32.totalorder %s28, 0
      %p81 = por %p79, %p80
      %s83 = sadd.s32 %s82, 1
      %p86 = scmp.eq.s32.totalorder %s22, 1
      %p87 = scmp.ne.s32.totalorder %s82, %s84
      %p88 = scmp.eq.s32.totalorder %s22, 0
      %p89 = por %p87, %p88
      %p90 = scmp.ne.s32.totalorder %s82, %s84
      %p91 = scmp.eq.s32.totalorder %s27, 1
      %p92 = por %p90, %p91
      %p93 = scmp.ne.s32.totalorder %s84, %s85
      %p94 = scmp.eq.s32.totalorder %s27, 0
      %p95 = por %p93, %p94
      %p96 = scmp.ne.s32.totalorder %s84, %s85
      %p97 = scmp.eq.s32.totalorder %s28, 1
      %p98 = por %p96, %p97
      %p100 = scmp.ne.s32.totalorder %s85, %s99
      %p101 = scmp.eq.s32.totalorder %s28, 0
      %p102 = por %p100, %p101
      %s104 = sadd.s32 %s103, 1
      %p107 = scmp.eq.s32.totalorder %s22, 1
      %p108 = scmp.ne.s32.totalorder %s103, %s105
      %p109 = scmp.eq.s32.totalorder %s22, 0
      %p110 = por %p108, %p109
      %p111 = scmp.ne.s32.totalorder %s103, %s105
      %p112 = scmp.eq.s32.totalorder %s27, 1
      %p113 = por %p111, %p112
      %p114 = scmp.ne.s32.totalorder %s105, %s106
      %p115 = scmp.eq.s32.totalorder %s27, 0
      %p116 = por %p114, %p115
      %p117 = scmp.ne.s32.totalorder %s105, %s106
      %p118 = scmp.eq.s32.totalorder %s28, 1
      %p119 = por %p117, %p118
      %p121 = scmp.ne.s32.totalorder %s106, %s120
      %p122 = scmp.eq.s32.totalorder %s28, 0
      %p123 = por %p121, %p122
      %s125 = sadd.s32 %s124, 1
      %p128 = scmp.eq.s32.totalorder %s22, 1
      %p129 = scmp.ne.s32.totalorder %s124, %s126
      %p130 = scmp.eq.s32.totalorder %s22, 0
      %p131 = por %p129, %p130
      %p132 = scmp.ne.s32.totalorder %s124, %s126
      %p133 = scmp.eq.s32.totalorder %s27, 1
      %p134 = por %p132, %p133
      %p135 = scmp.ne.s32.totalorder %s126, %s127
      %p136 = scmp.eq.s32.totalorder %s27, 0
      %p137 = por %p135, %p136
      %p138 = scmp.ne.s32.totalorder %s126, %s127
      %p139 = scmp.eq.s32.totalorder %s28, 1
      %p140 = por %p138, %p139
      %p142 = scmp.ne.s32.totalorder %s127, %s141
      %p143 = scmp.eq.s32.totalorder %s28, 0
      %p144 = por %p142, %p143
      %s146 = sadd.s32 %s145, 1
      %p149 = scmp.eq.s32.totalorder %s22, 1
      %p150 = scmp.ne.s32.totalorder %s145, %s147
      %p151 = scmp.eq.s32.totalorder %s22, 0
      %p152 = por %p150, %p151
      %p153 = scmp.ne.s32.totalorder %s145, %s147
      %p154 = scmp.eq.s32.totalorder %s27, 1
      %p155 = por %p153, %p154
      %p156 = scmp.ne.s32.totalorder %s147, %s148
      %p157 = scmp.eq.s32.totalorder %s27, 0
      %p158 = por %p156, %p157
      %p159 = scmp.ne.s32.totalorder %s147, %s148
      %p160 = scmp.eq.s32.totalorder %s28, 1
      %p161 = por %p159, %p160
      %p163 = scmp.ne.s32.totalorder %s148, %s162
      %p164 = scmp.eq.s32.totalorder %s28, 0
      %p165 = por %p163, %p164
      %s166 = ssub.s32 %s22, %s29
      %p167 = scmp.eq.s32.totalorder %s166, 0
      %s169 = sadd.s32 %s168, 1
      %s170 = scalar_select %p167, %s168, %s169
      %p173 = pneg %p167
      %p174 = scmp.eq.s32.totalorder %s22, 1
      %p175 = por %p173, %p174
      %p176 = scmp.ne.s32.totalorder %s168, %s171
      %p177 = scmp.eq.s32.totalorder %s22, 0
      %p178 = por %p176, %p177
      %p179 = scmp.ne.s32.totalorder %s168, %s171
      %p180 = scmp.eq.s32.totalorder %s27, 1
      %p181 = por %p179, %p180
      %p182 = scmp.ne.s32.totalorder %s171, %s172
      %p183 = scmp.eq.s32.totalorder %s27, 0
      %p184 = por %p182, %p183
      %p185 = scmp.ne.s32.totalorder %s171, %s172
      %p186 = scmp.eq.s32.totalorder %s28, 1
      %p187 = por %p185, %p186
      %p189 = scmp.ne.s32.totalorder %s172, %s188
      %p190 = scmp.eq.s32.totalorder %s28, 0
      %p191 = por %p189, %p190
      %s192 = ssub.s32 %s22, %s29
      %p193 = scmp.eq.s32.totalorder %s192, 0
      %s195 = sadd.s32 %s194, 1
      %s196 = scalar_select %p193, %s194, %s195
      %p199 = pneg %p193
      %p200 = scmp.eq.s32.totalorder %s22, 1
      %p201 = por %p199, %p200
      %p202 = scmp.ne.s32.totalorder %s194, %s197
      %p203 = scmp.eq.s32.totalorder %s22, 0
      %p204 = por %p202, %p203
      %p205 = scmp.ne.s32.totalorder %s194, %s197
      %p206 = scmp.eq.s32.totalorder %s27, 1
      %p207 = por %p205, %p206
      %p208 = scmp.ne.s32.totalorder %s197, %s198
      %p209 = scmp.eq.s32.totalorder %s27, 0
      %p210 = por %p208, %p209
      %p211 = scmp.ne.s32.totalorder %s197, %s198
      %p212 = scmp.eq.s32.totalorder %s28, 1
      %p213 = por %p211, %p212
      %p215 = scmp.ne.s32.totalorder %s198, %s214
      %p216 = scmp.eq.s32.totalorder %s28, 0
      %p217 = por %p215, %p216
      %p218 = scmp.le.s32.totalorder 1, %s22
      %p219 = scmp.lt.s32.totalorder %s22, 3
      %p220 = pnand %p218, %p219
      %p221 = pneg %p220
      // Predicated region
      $region9: #{tpu_custom_call.1} parent=5 // pred_check
        _
      $region10: #{tpu_custom_call.1} parent=5 // pred_check_branch
        %223 = sbr.rel (%p220) target = $region12
      $region11: #{tpu_custom_call.1} parent=5 // pred_region
        %s224 = ssub.s32 %s22, 1
        // Predicated region
        $region13: #{tpu_custom_call.1} parent=11 // pred_check
          %p225 = pneg %p95
        $region14: #{tpu_custom_call.1} parent=11 // pred_check_branch
          %227 = sbr.rel (%p225) target = $region16
        $region15: #{tpu_custom_call.1} parent=11 // pred_region
          %s229 = ssub.s32 2048, 2048
          %230 = vsyncadd [#allocation3], %s229
          %s231 = sshll.u32 [#allocation2], 4
          %s232 = int_to_ptr.vmem [resolvable:$true] %s231
          %237 = dma.hbm_to_vmem [thread:$0]  %s2, 2048, %s232, [#allocation3], 128, 128, 8
        $region16: #{tpu_custom_call.1} parent=11 // pred_fallthru
          _
        // Predicated region
        $region17: #{tpu_custom_call.1} parent=11 // pred_check
          %p238 = pneg %p116
        $region18: #{tpu_custom_call.1} parent=11 // pred_check_branch
          %240 = sbr.rel (%p238) target = $region20
        $region19: #{tpu_custom_call.1} parent=11 // pred_region
          %s242 = ssub.s32 6144, 6144
          %243 = vsyncadd [#allocation6], %s242
          %s244 = sshll.u32 [#allocation5], 4
          %s245 = int_to_ptr.vmem [resolvable:$true] %s244
          %250 = dma.hbm_to_vmem [thread:$0]  %s3, 6144, %s245, [#allocation6], 384, 384, 24
        $region20: #{tpu_custom_call.1} parent=11 // pred_fallthru
          _
        // Predicated region
        $region21: #{tpu_custom_call.1} parent=11 // pred_check
          %p251 = pneg %p137
        $region22: #{tpu_custom_call.1} parent=11 // pred_check_branch
          %253 = sbr.rel (%p251) target = $region24
        $region23: #{tpu_custom_call.1} parent=11 // pred_region
          _
        $region24: #{tpu_custom_call.1} parent=11 // pred_fallthru
          _
        // Predicated region
        $region25: #{tpu_custom_call.1} parent=11 // pred_check
          %p254 = pneg %p158
        $region26: #{tpu_custom_call.1} parent=11 // pred_check_branch
          %256 = sbr.rel (%p254) target = $region28
        $region27: #{tpu_custom_call.1} parent=11 // pred_region
          _
        $region28: #{tpu_custom_call.1} parent=11 // pred_fallthru
          _
      $region12: #{tpu_custom_call.1} parent=5 // pred_fallthru
        _
      %p257 = scmp.lt.s32.totalorder %s22, 2
      // Predicated region
      $region29: #{tpu_custom_call.1} parent=5 // pred_check
        %p258 = pneg %p257
      $region30: #{tpu_custom_call.1} parent=5 // pred_check_branch
        %260 = sbr.rel (%p258) target = $region32
      $region31: #{tpu_custom_call.1} parent=5 // pred_region
        // Predicated region
        $region33: #{tpu_custom_call.1} parent=31 // pred_check
          %p261 = pneg %p42
        $region34: #{tpu_custom_call.1} parent=31 // pred_check_branch
          %263 = sbr.rel (%p261) target = $region36
        $region35: #{tpu_custom_call.1} parent=31 // pred_region
          %s264 = smul.u32 16, %s22
          %p265 = scmp.lt.s32.totalorder %s264, 31
          %s266 = scalar_select %p265, %s264, 31
          %s267 = smul.addr %s266, 8
          %s268 = scalar_lea.vmem %s0, %s267
          %s269 = smul.u32 16, %s22
        $region36: #{tpu_custom_call.1} parent=31 // pred_fallthru
          _
        // Predicated region
        $region37: #{tpu_custom_call.1} parent=31 // pred_check
          %p270 = pneg %p68
        $region38: #{tpu_custom_call.1} parent=31 // pred_check_branch
          %272 = sbr.rel (%p270) target = $region40
        $region39: #{tpu_custom_call.1} parent=31 // pred_region
          %s273 = smul.u32 16, %s22
          %p274 = scmp.lt.s32.totalorder %s273, 31
          %s275 = scalar_select %p274, %s273, 31
          %s276 = smul.addr %s275, 8
          %s277 = scalar_lea.vmem %s1, %s276
          %s278 = smul.u32 16, %s22
        $region40: #{tpu_custom_call.1} parent=31 // pred_fallthru
          _
      $region32: #{tpu_custom_call.1} parent=5 // pred_fallthru
        _
      %p279 = scmp.le.s32.totalorder 1, %s22
      %p280 = scmp.lt.s32.totalorder %s22, 3
      %p281 = pnand %p279, %p280
      %p282 = pneg %p281
      // Predicated region
      $region41: #{tpu_custom_call.1} parent=5 // pred_check
        _
      $region42: #{tpu_custom_call.1} parent=5 // pred_check_branch
        %284 = sbr.rel (%p281) target = $region44
      $region43: #{tpu_custom_call.1} parent=5 // pred_region
        %s285 = ssub.s32 %s22, 1
        // Predicated region
        $region45: #{tpu_custom_call.1} parent=43 // pred_check
          %p286 = pneg %p95
        $region46: #{tpu_custom_call.1} parent=43 // pred_check_branch
          %288 = sbr.rel (%p286) target = $region48
        $region47: #{tpu_custom_call.1} parent=43 // pred_region
          %289 = dma.done [#allocation3], 2048
        $region48: #{tpu_custom_call.1} parent=43 // pred_fallthru
          _
        // Predicated region
        $region49: #{tpu_custom_call.1} parent=43 // pred_check
          %p290 = pneg %p116
        $region50: #{tpu_custom_call.1} parent=43 // pred_check_branch
          %292 = sbr.rel (%p290) target = $region52
        $region51: #{tpu_custom_call.1} parent=43 // pred_region
          %293 = dma.done [#allocation6], 6144
        $region52: #{tpu_custom_call.1} parent=43 // pred_fallthru
          _
        %s294 = smul.u32 16, %s27
        %p295 = scmp.lt.s32.totalorder %s294, 31
        %s296 = scalar_select %p295, %s294, 31
        %s297 = smul.addr %s296, 8
        %s298 = scalar_lea.vmem %s0, %s297
        %p299 = pneg %p48
        %p300 = pneg %p45
        %s301 = smul.u32 16, %s27
        %p302 = scmp.lt.s32.totalorder %s301, 31
        %s303 = scalar_select %p302, %s301, 31
        %s304 = smul.addr %s303, 8
        %s305 = scalar_lea.vmem %s1, %s304
        %p306 = pneg %p74
        %p307 = pneg %p71
        %p308 = pneg %p95
        %p309 = pneg %p92
        %p310 = pneg %p116
        %p311 = pneg %p113
        %p312 = pneg %p137
        %p313 = pneg %p134
        %p314 = pneg %p158
        %p315 = pneg %p155
        %p316 = pneg %p184
        %p317 = pneg %p181
        %s318 = sand.u32 %s171, 1
        %s319 = scalar_lea.sflag [#allocation4], %s318
        %s320 = sand.u32 %s171, 1
        %s321 = smul.addr %s320, 384
        %s322 = scalar_lea.vmem [#allocation7], %s321
        %p323 = pneg %p210
        %p324 = pneg %p207
        %s325 = sand.u32 %s197, 1
        %s326 = scalar_lea.sflag [#allocation9], %s325
        %s327 = sand.u32 %s197, 1
        %s328 = smul.addr %s327, 256
        %s329 = scalar_lea.vmem [#allocation8], %s328
        %s330 = smul.u32 16, %s27
        %p331 = scmp.lt.s32.totalorder %s330, 31
        %s332 = scalar_select %p331, %s330, 31
        %s333 = smul.addr %s332, 8
        %s334 = scalar_lea.vmem %s0, %s333
        %s335 = smul.u32 16, %s27
        %s336 = smul.u32 16, %s27
        %p337 = scmp.lt.s32.totalorder %s336, 31
        %s338 = scalar_select %p337, %s336, 31
        %s339 = smul.addr %s338, 8
        %s340 = scalar_lea.vmem %s1, %s339
        %s341 = smul.u32 16, %s27
        %s342 = smul.u32 16, %s27
        %s343 = smul.u32 16, %s27
        %v344 = vld [vmem:[%s334] sm:$0xff]
        %v345 = vld [vmem:[%s334 + $0x8] sm:$0xff]
        %v346 = vld [vmem:[%s334 + $0x10] sm:$0xff]
        %v347 = vld [vmem:[%s334 + $0x18] sm:$0xff]
        %v348 = vld [vmem:[%s334 + $0x20] sm:$0xff]
        %v349 = vld [vmem:[%s334 + $0x28] sm:$0xff]
        %v350 = vld [vmem:[%s334 + $0x30] sm:$0xff]
        %v351 = vld [vmem:[%s334 + $0x38] sm:$0xff]
        %v352 = vld [vmem:[%s334 + $0x40] sm:$0xff]
        %v353 = vld [vmem:[%s334 + $0x48] sm:$0xff]
        %v354 = vld [vmem:[%s334 + $0x50] sm:$0xff]
        %v355 = vld [vmem:[%s334 + $0x58] sm:$0xff]
        %v356 = vld [vmem:[%s334 + $0x60] sm:$0xff]
        %v357 = vld [vmem:[%s334 + $0x68] sm:$0xff]
        %v358 = vld [vmem:[%s334 + $0x70] sm:$0xff]
        %v359 = vld [vmem:[%s334 + $0x78] sm:$0xff]
        %v360 = vld [vmem:[#allocation2] sm:$0xff]
        %v361 = vld [vmem:[#allocation2 + $0x8] sm:$0xff]
        %v362 = vld [vmem:[#allocation2 + $0x10] sm:$0xff]
        %v363 = vld [vmem:[#allocation2 + $0x18] sm:$0xff]
        %v364 = vld [vmem:[#allocation2 + $0x20] sm:$0xff]
        %v365 = vld [vmem:[#allocation2 + $0x28] sm:$0xff]
        %v366 = vld [vmem:[#allocation2 + $0x30] sm:$0xff]
        %v367 = vld [vmem:[#allocation2 + $0x38] sm:$0xff]
        %v368 = vld [vmem:[#allocation2 + $0x40] sm:$0xff]
        %v369 = vld [vmem:[#allocation2 + $0x48] sm:$0xff]
        %v370 = vld [vmem:[#allocation2 + $0x50] sm:$0xff]
        %v371 = vld [vmem:[#allocation2 + $0x58] sm:$0xff]
        %v372 = vld [vmem:[#allocation2 + $0x60] sm:$0xff]
        %v373 = vld [vmem:[#allocation2 + $0x68] sm:$0xff]
        %v374 = vld [vmem:[#allocation2 + $0x70] sm:$0xff]
        %v375 = vld [vmem:[#allocation2 + $0x78] sm:$0xff]
        %v376 = vld [vmem:[%s5] sm:$0x1]
        %v378 = vlaneseq
        %v379 = vshrl.u32 %v378, 7
        %v380 = vsub.s32 0, %v379
        %v381 = vrot.slane %v376, %v380
        %383 = vmatprep.subr.mxu0 0.0
        %384 = vmatpush1.msra.mxu0 %v360
        %385 = vmatprep.subr.mxu0 0.0
        %386 = vmatpush1.msra.mxu0 %v361
        %387 = vmatprep.subr.mxu0 0.0
        %388 = vmatpush1.msra.mxu0 %v362
        %389 = vmatprep.subr.mxu0 0.0
        %390 = vmatpush1.msra.mxu0 %v363
        %391 = vmatprep.subr.mxu0 0.0
        %392 = vmatpush1.msra.mxu0 %v364
        %393 = vmatprep.subr.mxu0 0.0
        %394 = vmatpush1.msra.mxu0 %v365
        %395 = vmatprep.subr.mxu0 0.0
        %396 = vmatpush1.msra.mxu0 %v366
        %397 = vmatprep.subr.mxu0 0.0
        %398 = vmatpush1.msra.mxu0 %v367
        %399 = vmatprep.subr.mxu0 0.0
        %400 = vmatpush1.msra.mxu0 %v368
        %401 = vmatprep.subr.mxu0 0.0
        %402 = vmatpush1.msra.mxu0 %v369
        %403 = vmatprep.subr.mxu0 0.0
        %404 = vmatpush1.msra.mxu0 %v370
        %405 = vmatprep.subr.mxu0 0.0
        %406 = vmatpush1.msra.mxu0 %v371
        %407 = vmatprep.subr.mxu0 0.0
        %408 = vmatpush1.msra.mxu0 %v372
        %409 = vmatprep.subr.mxu0 0.0
        %410 = vmatpush1.msra.mxu0 %v373
        %411 = vmatprep.subr.mxu0 0.0
        %412 = vmatpush1.msra.mxu0 %v374
        %413 = vmatprep.subr.mxu0 0.0
        %414 = vmatpush1.msra.mxu0 %v375
        %415 = vmatprep.subr.mxu0 0.0
        %416 = vmatpush1.msra.mxu0 0.0
        %417 = vmatprep.subr.mxu0 0.0
        %418 = vmatpush1.msra.mxu0 0.0
        %419 = vmatprep.subr.mxu0 0.0
        %420 = vmatpush1.msra.mxu0 0.0
        %421 = vmatprep.subr.mxu0 0.0
        %422 = vmatpush1.msra.mxu0 0.0
        %423 = vmatprep.subr.mxu0 0.0
        %424 = vmatpush1.msra.mxu0 0.0
        %425 = vmatprep.subr.mxu0 0.0
        %426 = vmatpush1.msra.mxu0 0.0
        %427 = vmatprep.subr.mxu0 0.0
        %428 = vmatpush1.msra.mxu0 0.0
        %429 = vmatprep.subr.mxu0 0.0
        %430 = vmatpush1.msra.mxu0 0.0
        %431 = vmatprep.subr.mxu0 0.0
        %432 = vmatpush1.msra.mxu0 0.0
        %433 = vmatprep.subr.mxu0 0.0
        %434 = vmatpush1.msra.mxu0 0.0
        %435 = vmatprep.subr.mxu0 0.0
        %436 = vmatpush1.msra.mxu0 0.0
        %437 = vmatprep.subr.mxu0 0.0
        %438 = vmatpush1.msra.mxu0 0.0
        %439 = vmatprep.subr.mxu0 0.0
        %440 = vmatpush1.msra.mxu0 0.0
        %441 = vmatprep.subr.mxu0 0.0
        %442 = vmatpush1.msra.mxu0 0.0
        %443 = vmatprep.subr.mxu0 0.0
        %444 = vmatpush1.msra.mxu0 0.0
        %445 = vmatprep.subr.mxu0 0.0
        %446 = vmatpush1.msra.mxu0 0.0
        %447 = vmatprep.mubr.f32.mxu0 0.0
        %448 = vmatmul.mubr.f32.gmra.mrb[0].mxu0 %v344
        %v449 = vpop.f32.mrb[0].mxu0
        %v450 = vadd.f32 %v381, %v449
        %v451 = vpop.f32.mrb[0].mxu0
        %452 = vmatprep.mubr.f32.mxu0 0.0
        %453 = vmatmul.mubr.f32.gmra.mrb[0].mxu0 %v345
        %v454 = vpop.f32.mrb[0].mxu0
        %v455 = vadd.f32 %v381, %v454
        %v456 = vpop.f32.mrb[0].mxu0
        %457 = vmatprep.mubr.f32.mxu0 0.0
        %458 = vmatmul.mubr.f32.gmra.mrb[0].mxu0 %v346
        %v459 = vpop.f32.mrb[0].mxu0
        %v460 = vadd.f32 %v381, %v459
        %v461 = vpop.f32.mrb[0].mxu0
        %462 = vmatprep.mubr.f32.mxu0 0.0
        %463 = vmatmul.mubr.f32.gmra.mrb[0].mxu0 %v347
        %v464 = vpop.f32.mrb[0].mxu0
        %v465 = vadd.f32 %v381, %v464
        %v466 = vpop.f32.mrb[0].mxu0
        %467 = vmatprep.mubr.f32.mxu0 0.0
        %468 = vmatmul.mubr.f32.gmra.mrb[0].mxu0 %v348
        %v469 = vpop.f32.mrb[0].mxu0
        %v470 = vadd.f32 %v381, %v469
        %v471 = vpop.f32.mrb[0].mxu0
        %472 = vmatprep.mubr.f32.mxu0 0.0
        %473 = vmatmul.mubr.f32.gmra.mrb[0].mxu0 %v349
        %v474 = vpop.f32.mrb[0].mxu0
        %v475 = vadd.f32 %v381, %v474
        %v476 = vpop.f32.mrb[0].mxu0
        %477 = vmatprep.mubr.f32.mxu0 0.0
        %478 = vmatmul.mubr.f32.gmra.mrb[0].mxu0 %v350
        %v479 = vpop.f32.mrb[0].mxu0
        %v480 = vadd.f32 %v381, %v479
        %v481 = vpop.f32.mrb[0].mxu0
        %482 = vmatprep.mubr.f32.mxu0 0.0
        %483 = vmatmul.mubr.f32.gmra.mrb[0].mxu0 %v351
        %v484 = vpop.f32.mrb[0].mxu0
        %v485 = vadd.f32 %v381, %v484
        %v486 = vpop.f32.mrb[0].mxu0
        %487 = vmatprep.mubr.f32.mxu0 0.0
        %488 = vmatmul.mubr.f32.gmra.mrb[0].mxu0 %v352
        %v489 = vpop.f32.mrb[0].mxu0
        %v490 = vadd.f32 %v381, %v489
        %v491 = vpop.f32.mrb[0].mxu0
        %492 = vmatprep.mubr.f32.mxu0 0.0
        %493 = vmatmul.mubr.f32.gmra.mrb[0].mxu0 %v353
        %v494 = vpop.f32.mrb[0].mxu0
        %v495 = vadd.f32 %v381, %v494
        %v496 = vpop.f32.mrb[0].mxu0
        %497 = vmatprep.mubr.f32.mxu0 0.0
        %498 = vmatmul.mubr.f32.gmra.mrb[0].mxu0 %v354
        %v499 = vpop.f32.mrb[0].mxu0
        %v500 = vadd.f32 %v381, %v499
        %v501 = vpop.f32.mrb[0].mxu0
        %502 = vmatprep.mubr.f32.mxu0 0.0
        %503 = vmatmul.mubr.f32.gmra.mrb[0].mxu0 %v355
        %v504 = vpop.f32.mrb[0].mxu0
        %v505 = vadd.f32 %v381, %v504
        %v506 = vpop.f32.mrb[0].mxu0
        %507 = vmatprep.mubr.f32.mxu0 0.0
        %508 = vmatmul.mubr.f32.gmra.mrb[0].mxu0 %v356
        %v509 = vpop.f32.mrb[0].mxu0
        %v510 = vadd.f32 %v381, %v509
        %v511 = vpop.f32.mrb[0].mxu0
        %512 = vmatprep.mubr.f32.mxu0 0.0
        %513 = vmatmul.mubr.f32.gmra.mrb[0].mxu0 %v357
        %v514 = vpop.f32.mrb[0].mxu0
        %v515 = vadd.f32 %v381, %v514
        %v516 = vpop.f32.mrb[0].mxu0
        %517 = vmatprep.mubr.f32.mxu0 0.0
        %518 = vmatmul.mubr.f32.gmra.mrb[0].mxu0 %v358
        %v519 = vpop.f32.mrb[0].mxu0
        %v520 = vadd.f32 %v381, %v519
        %v521 = vpop.f32.mrb[0].mxu0
        %522 = vmatprep.mubr.f32.mxu0 0.0
        %523 = vmatmul.mubr.f32.gmra.mrb[0].mxu0 %v359
        %v524 = vpop.f32.mrb[0].mxu0
        %v525 = vadd.f32 %v381, %v524
        %v526 = vpop.f32.mrb[0].mxu0
        %527 = vdwg.mxu0
        %v528 = vmul.f32 %v450, 0.5
        %v529 = vmul.f32 %v455, 0.5
        %v530 = vmul.f32 %v460, 0.5
        %v531 = vmul.f32 %v465, 0.5
        %v532 = vmul.f32 %v470, 0.5
        %v533 = vmul.f32 %v475, 0.5
        %v534 = vmul.f32 %v480, 0.5
        %v535 = vmul.f32 %v485, 0.5
        %v536 = vmul.f32 %v490, 0.5
        %v537 = vmul.f32 %v495, 0.5
        %v538 = vmul.f32 %v500, 0.5
        %v539 = vmul.f32 %v505, 0.5
        %v540 = vmul.f32 %v510, 0.5
        %v541 = vmul.f32 %v515, 0.5
        %v542 = vmul.f32 %v520, 0.5
        %v543 = vmul.f32 %v525, 0.5
        %v544 = vtanh.pop %v528
        %v545 = vtanh.pop %v529
        %v546 = vtanh.pop %v530
        %v547 = vtanh.pop %v531
        %v548 = vtanh.pop %v532
        %v549 = vtanh.pop %v533
        %v550 = vtanh.pop %v534
        %v551 = vtanh.pop %v535
        %v552 = vtanh.pop %v536
        %v553 = vtanh.pop %v537
        %v554 = vtanh.pop %v538
        %v555 = vtanh.pop %v539
        %v556 = vtanh.pop %v540
        %v557 = vtanh.pop %v541
        %v558 = vtanh.pop %v542
        %v559 = vtanh.pop %v543
        %v560 = vadd.f32 %v544, 1.0
        %v561 = vadd.f32 %v545, 1.0
        %v562 = vadd.f32 %v546, 1.0
        %v563 = vadd.f32 %v547, 1.0
        %v564 = vadd.f32 %v548, 1.0
        %v565 = vadd.f32 %v549, 1.0
        %v566 = vadd.f32 %v550, 1.0
        %v567 = vadd.f32 %v551, 1.0
        %v568 = vadd.f32 %v552, 1.0
        %v569 = vadd.f32 %v553, 1.0
        %v570 = vadd.f32 %v554, 1.0
        %v571 = vadd.f32 %v555, 1.0
        %v572 = vadd.f32 %v556, 1.0
        %v573 = vadd.f32 %v557, 1.0
        %v574 = vadd.f32 %v558, 1.0
        %v575 = vadd.f32 %v559, 1.0
        %v576 = vmul.f32 %v560, 0.5
        %v577 = vmul.f32 %v561, 0.5
        %v578 = vmul.f32 %v562, 0.5
        %v579 = vmul.f32 %v563, 0.5
        %v580 = vmul.f32 %v564, 0.5
        %v581 = vmul.f32 %v565, 0.5
        %v582 = vmul.f32 %v566, 0.5
        %v583 = vmul.f32 %v567, 0.5
        %v584 = vmul.f32 %v568, 0.5
        %v585 = vmul.f32 %v569, 0.5
        %v586 = vmul.f32 %v570, 0.5
        %v587 = vmul.f32 %v571, 0.5
        %v588 = vmul.f32 %v572, 0.5
        %v589 = vmul.f32 %v573, 0.5
        %v590 = vmul.f32 %v574, 0.5
        %v591 = vmul.f32 %v575, 0.5
        %v592 = vmul.f32 %v450, %v576
        %v593 = vmul.f32 %v455, %v577
        %v594 = vmul.f32 %v460, %v578
        %v595 = vmul.f32 %v465, %v579
        %v596 = vmul.f32 %v470, %v580
        %v597 = vmul.f32 %v475, %v581
        %v598 = vmul.f32 %v480, %v582
        %v599 = vmul.f32 %v485, %v583
        %v600 = vmul.f32 %v490, %v584
        %v601 = vmul.f32 %v495, %v585
        %v602 = vmul.f32 %v500, %v586
        %v603 = vmul.f32 %v505, %v587
        %v604 = vmul.f32 %v510, %v588
        %v605 = vmul.f32 %v515, %v589
        %v606 = vmul.f32 %v520, %v590
        %v607 = vmul.f32 %v525, %v591
        %v608 = vld [vmem:[#allocation5] sm:$0xff]
        %v609 = vld [vmem:[#allocation5 + $0x8] sm:$0xff]
        %v610 = vld [vmem:[#allocation5 + $0x10] sm:$0xff]
        %v611 = vld [vmem:[#allocation5 + $0x18] sm:$0xff]
        %v612 = vld [vmem:[#allocation5 + $0x20] sm:$0xff]
        %v613 = vld [vmem:[#allocation5 + $0x28] sm:$0xff]
        %v614 = vld [vmem:[#allocation5 + $0x30] sm:$0xff]
        %v615 = vld [vmem:[#allocation5 + $0x38] sm:$0xff]
        %v616 = vld [vmem:[#allocation5 + $0x40] sm:$0xff]
        %v617 = vld [vmem:[#allocation5 + $0x48] sm:$0xff]
        %v618 = vld [vmem:[#allocation5 + $0x50] sm:$0xff]
        %v619 = vld [vmem:[#allocation5 + $0x58] sm:$0xff]
        %v620 = vld [vmem:[#allocation5 + $0x60] sm:$0xff]
        %v621 = vld [vmem:[#allocation5 + $0x68] sm:$0xff]
        %v622 = vld [vmem:[#allocation5 + $0x70] sm:$0xff]
        %v623 = vld [vmem:[#allocation5 + $0x78] sm:$0xff]
        %v624 = vld [vmem:[#allocation5 + $0x80] sm:$0xff]
        %v625 = vld [vmem:[#allocation5 + $0x88] sm:$0xff]
        %v626 = vld [vmem:[#allocation5 + $0x90] sm:$0xff]
        %v627 = vld [vmem:[#allocation5 + $0x98] sm:$0xff]
        %v628 = vld [vmem:[#allocation5 + $0xa0] sm:$0xff]
        %v629 = vld [vmem:[#allocation5 + $0xa8] sm:$0xff]
        %v630 = vld [vmem:[#allocation5 + $0xb0] sm:$0xff]
        %v631 = vld [vmem:[#allocation5 + $0xb8] sm:$0xff]
        %v632 = vld [vmem:[#allocation5 + $0xc0] sm:$0xff]
        %v633 = vld [vmem:[#allocation5 + $0xc8] sm:$0xff]
        %v634 = vld [vmem:[#allocation5 + $0xd0] sm:$0xff]
        %v635 = vld [vmem:[#allocation5 + $0xd8] sm:$0xff]
        %v636 = vld [vmem:[#allocation5 + $0xe0] sm:$0xff]
        %v637 = vld [vmem:[#allocation5 + $0xe8] sm:$0xff]
        %v638 = vld [vmem:[#allocation5 + $0xf0] sm:$0xff]
        %v639 = vld [vmem:[#allocation5 + $0xf8] sm:$0xff]
        %v640 = vld [vmem:[#allocation5 + $0x100] sm:$0xff]
        %v641 = vld [vmem:[#allocation5 + $0x108] sm:$0xff]
        %v642 = vld [vmem:[#allocation5 + $0x110] sm:$0xff]
        %v643 = vld [vmem:[#allocation5 + $0x118] sm:$0xff]
        %v644 = vld [vmem:[#allocation5 + $0x120] sm:$0xff]
        %v645 = vld [vmem:[#allocation5 + $0x128] sm:$0xff]
        %v646 = vld [vmem:[#allocation5 + $0x130] sm:$0xff]
        %v647 = vld [vmem:[#allocation5 + $0x138] sm:$0xff]
        %v648 = vld [vmem:[#allocation5 + $0x140] sm:$0xff]
        %v649 = vld [vmem:[#allocation5 + $0x148] sm:$0xff]
        %v650 = vld [vmem:[#allocation5 + $0x150] sm:$0xff]
        %v651 = vld [vmem:[#allocation5 + $0x158] sm:$0xff]
        %v652 = vld [vmem:[#allocation5 + $0x160] sm:$0xff]
        %v653 = vld [vmem:[#allocation5 + $0x168] sm:$0xff]
        %v654 = vld [vmem:[#allocation5 + $0x170] sm:$0xff]
        %v655 = vld [vmem:[#allocation5 + $0x178] sm:$0xff]
        %656 = vmatprep.subr.mxu0 %v609
        %657 = vmatpush1.msra.mxu0 %v608
        %658 = vmatprep.subr.mxu0 %v612
        %659 = vmatpush1.msra.mxu0 %v611
        %660 = vmatprep.subr.mxu0 %v615
        %661 = vmatpush1.msra.mxu0 %v614
        %662 = vmatprep.subr.mxu0 %v618
        %663 = vmatpush1.msra.mxu0 %v617
        %664 = vmatprep.subr.mxu0 %v621
        %665 = vmatpush1.msra.mxu0 %v620
        %666 = vmatprep.subr.mxu0 %v624
        %667 = vmatpush1.msra.mxu0 %v623
        %668 = vmatprep.subr.mxu0 %v627
        %669 = vmatpush1.msra.mxu0 %v626
        %670 = vmatprep.subr.mxu0 %v630
        %671 = vmatpush1.msra.mxu0 %v629
        %672 = vmatprep.subr.mxu0 %v633
        %673 = vmatpush1.msra.mxu0 %v632
        %674 = vmatprep.subr.mxu0 %v636
        %675 = vmatpush1.msra.mxu0 %v635
        %676 = vmatprep.subr.mxu0 %v639
        %677 = vmatpush1.msra.mxu0 %v638
        %678 = vmatprep.subr.mxu0 %v642
        %679 = vmatpush1.msra.mxu0 %v641
        %680 = vmatprep.subr.mxu0 %v645
        %681 = vmatpush1.msra.mxu0 %v644
        %682 = vmatprep.subr.mxu0 %v648
        %683 = vmatpush1.msra.mxu0 %v647
        %684 = vmatprep.subr.mxu0 %v651
        %685 = vmatpush1.msra.mxu0 %v650
        %686 = vmatprep.subr.mxu0 %v654
        %687 = vmatpush1.msra.mxu0 %v653
        %688 = vmatprep.subr.mxu0 0.0
        %689 = vmatpush1.msra.mxu0 0.0
        %690 = vmatprep.subr.mxu0 0.0
        %691 = vmatpush1.msra.mxu0 0.0
        %692 = vmatprep.subr.mxu0 0.0
        %693 = vmatpush1.msra.mxu0 0.0
        %694 = vmatprep.subr.mxu0 0.0
        %695 = vmatpush1.msra.mxu0 0.0
        %696 = vmatprep.subr.mxu0 0.0
        %697 = vmatpush1.msra.mxu0 0.0
        %698 = vmatprep.subr.mxu0 0.0
        %699 = vmatpush1.msra.mxu0 0.0
        %700 = vmatprep.subr.mxu0 0.0
        %701 = vmatpush1.msra.mxu0 0.0
        %702 = vmatprep.subr.mxu0 0.0
        %703 = vmatpush1.msra.mxu0 0.0
        %704 = vmatprep.subr.mxu0 0.0
        %705 = vmatpush1.msra.mxu0 0.0
        %706 = vmatprep.subr.mxu0 0.0
        %707 = vmatpush1.msra.mxu0 0.0
        %708 = vmatprep.subr.mxu0 0.0
        %709 = vmatpush1.msra.mxu0 0.0
        %710 = vmatprep.subr.mxu0 0.0
        %711 = vmatpush1.msra.mxu0 0.0
        %712 = vmatprep.subr.mxu0 0.0
        %713 = vmatpush1.msra.mxu0 0.0
        %714 = vmatprep.subr.mxu0 0.0
        %715 = vmatpush1.msra.mxu0 0.0
        %716 = vmatprep.subr.mxu0 0.0
        %717 = vmatpush1.msra.mxu0 0.0
        %718 = vmatprep.subr.mxu0 0.0
        %719 = vmatpush1.msra.mxu0 0.0
        %720 = vmatprep.mubr.f32.mxu0 0.0
        %721 = vmatmul.mubr.f32.gmra.mrb[0].mxu0 %v592
        %v722 = vpop.f32.mrb[0].mxu0
        %v723 = vadd.f32 0.0, %v722
        %v724 = vpop.f32.mrb[0].mxu0
        %v725 = vadd.f32 0.0, %v724
        %726 = vmatprep.mubr.f32.mxu0 0.0
        %727 = vmatmul.mubr.f32.gmra.mrb[0].mxu0 %v593
        %v728 = vpop.f32.mrb[0].mxu0
        %v729 = vadd.f32 0.0, %v728
        %v730 = vpop.f32.mrb[0].mxu0
        %v731 = vadd.f32 0.0, %v730
        %732 = vmatprep.mubr.f32.mxu0 0.0
        %733 = vmatmul.mubr.f32.gmra.mrb[0].mxu0 %v594
        %v734 = vpop.f32.mrb[0].mxu0
        %v735 = vadd.f32 0.0, %v734
        %v736 = vpop.f32.mrb[0].mxu0
        %v737 = vadd.f32 0.0, %v736
        %738 = vmatprep.mubr.f32.mxu0 0.0
        %739 = vmatmul.mubr.f32.gmra.mrb[0].mxu0 %v595
        %v740 = vpop.f32.mrb[0].mxu0
        %v741 = vadd.f32 0.0, %v740
        %v742 = vpop.f32.mrb[0].mxu0
        %v743 = vadd.f32 0.0, %v742
        %744 = vmatprep.mubr.f32.mxu0 0.0
        %745 = vmatmul.mubr.f32.gmra.mrb[0].mxu0 %v596
        %v746 = vpop.f32.mrb[0].mxu0
        %v747 = vadd.f32 0.0, %v746
        %v748 = vpop.f32.mrb[0].mxu0
        %v749 = vadd.f32 0.0, %v748
        %750 = vmatprep.mubr.f32.mxu0 0.0
        %751 = vmatmul.mubr.f32.gmra.mrb[0].mxu0 %v597
        %v752 = vpop.f32.mrb[0].mxu0
        %v753 = vadd.f32 0.0, %v752
        %v754 = vpop.f32.mrb[0].mxu0
        %v755 = vadd.f32 0.0, %v754
        %756 = vmatprep.mubr.f32.mxu0 0.0
        %757 = vmatmul.mubr.f32.gmra.mrb[0].mxu0 %v598
        %v758 = vpop.f32.mrb[0].mxu0
        %v759 = vadd.f32 0.0, %v758
        %v760 = vpop.f32.mrb[0].mxu0
        %v761 = vadd.f32 0.0, %v760
        %762 = vmatprep.mubr.f32.mxu0 0.0
        %763 = vmatmul.mubr.f32.gmra.mrb[0].mxu0 %v599
        %v764 = vpop.f32.mrb[0].mxu0
        %v765 = vadd.f32 0.0, %v764
        %v766 = vpop.f32.mrb[0].mxu0
        %v767 = vadd.f32 0.0, %v766
        %768 = vmatprep.mubr.f32.mxu0 0.0
        %769 = vmatmul.mubr.f32.gmra.mrb[0].mxu0 %v600
        %v770 = vpop.f32.mrb[0].mxu0
        %v771 = vadd.f32 0.0, %v770
        %v772 = vpop.f32.mrb[0].mxu0
        %v773 = vadd.f32 0.0, %v772
        %774 = vmatprep.mubr.f32.mxu0 0.0
        %775 = vmatmul.mubr.f32.gmra.mrb[0].mxu0 %v601
        %v776 = vpop.f32.mrb[0].mxu0
        %v777 = vadd.f32 0.0, %v776
        %v778 = vpop.f32.mrb[0].mxu0
        %v779 = vadd.f32 0.0, %v778
        %780 = vmatprep.mubr.f32.mxu0 0.0
        %781 = vmatmul.mubr.f32.gmra.mrb[0].mxu0 %v602
        %v782 = vpop.f32.mrb[0].mxu0
        %v783 = vadd.f32 0.0, %v782
        %v784 = vpop.f32.mrb[0].mxu0
        %v785 = vadd.f32 0.0, %v784
        %786 = vmatprep.mubr.f32.mxu0 0.0
        %787 = vmatmul.mubr.f32.gmra.mrb[0].mxu0 %v603
        %v788 = vpop.f32.mrb[0].mxu0
        %v789 = vadd.f32 0.0, %v788
        %v790 = vpop.f32.mrb[0].mxu0
        %v791 = vadd.f32 0.0, %v790
        %792 = vmatprep.mubr.f32.mxu0 0.0
        %793 = vmatmul.mubr.f32.gmra.mrb[0].mxu0 %v604
        %v794 = vpop.f32.mrb[0].mxu0
        %v795 = vadd.f32 0.0, %v794
        %v796 = vpop.f32.mrb[0].mxu0
        %v797 = vadd.f32 0.0, %v796
        %798 = vmatprep.mubr.f32.mxu0 0.0
        %799 = vmatmul.mubr.f32.gmra.mrb[0].mxu0 %v605
        %v800 = vpop.f32.mrb[0].mxu0
        %v801 = vadd.f32 0.0, %v800
        %v802 = vpop.f32.mrb[0].mxu0
        %v803 = vadd.f32 0.0, %v802
        %804 = vmatprep.mubr.f32.mxu0 0.0
        %805 = vmatmul.mubr.f32.gmra.mrb[0].mxu0 %v606
        %v806 = vpop.f32.mrb[0].mxu0
        %v807 = vadd.f32 0.0, %v806
        %v808 = vpop.f32.mrb[0].mxu0
        %v809 = vadd.f32 0.0, %v808
        %810 = vmatprep.mubr.f32.mxu0 0.0
        %811 = vmatmul.mubr.f32.gmra.mrb[0].mxu0 %v607
        %v812 = vpop.f32.mrb[0].mxu0
        %v813 = vadd.f32 0.0, %v812
        %v814 = vpop.f32.mrb[0].mxu0
        %v815 = vadd.f32 0.0, %v814
        %816 = vdwg.mxu0
        %817 = vmatprep.subr.mxu0 0.0
        %818 = vmatpush1.msra.mxu0 %v610
        %819 = vmatprep.subr.mxu0 0.0
        %820 = vmatpush1.msra.mxu0 %v613
        %821 = vmatprep.subr.mxu0 0.0
        %822 = vmatpush1.msra.mxu0 %v616
        %823 = vmatprep.subr.mxu0 0.0
        %824 = vmatpush1.msra.mxu0 %v619
        %825 = vmatprep.subr.mxu0 0.0
        %826 = vmatpush1.msra.mxu0 %v622
        %827 = vmatprep.subr.mxu0 0.0
        %828 = vmatpush1.msra.mxu0 %v625
        %829 = vmatprep.subr.mxu0 0.0
        %830 = vmatpush1.msra.mxu0 %v628
        %831 = vmatprep.subr.mxu0 0.0
        %832 = vmatpush1.msra.mxu0 %v631
        %833 = vmatprep.subr.mxu0 0.0
        %834 = vmatpush1.msra.mxu0 %v634
        %835 = vmatprep.subr.mxu0 0.0
        %836 = vmatpush1.msra.mxu0 %v637
        %837 = vmatprep.subr.mxu0 0.0
        %838 = vmatpush1.msra.mxu0 %v640
        %839 = vmatprep.subr.mxu0 0.0
        %840 = vmatpush1.msra.mxu0 %v643
        %841 = vmatprep.subr.mxu0 0.0
        %842 = vmatpush1.msra.mxu0 %v646
        %843 = vmatprep.subr.mxu0 0.0
        %844 = vmatpush1.msra.mxu0 %v649
        %845 = vmatprep.subr.mxu0 0.0
        %846 = vmatpush1.msra.mxu0 %v652
        %847 = vmatprep.subr.mxu0 0.0
        %848 = vmatpush1.msra.mxu0 %v655
        %849 = vmatprep.subr.mxu0 0.0
        %850 = vmatpush1.msra.mxu0 0.0
        %851 = vmatprep.subr.mxu0 0.0
        %852 = vmatpush1.msra.mxu0 0.0
        %853 = vmatprep.subr.mxu0 0.0
        %854 = vmatpush1.msra.mxu0 0.0
        %855 = vmatprep.subr.mxu0 0.0
        %856 = vmatpush1.msra.mxu0 0.0
        %857 = vmatprep.subr.mxu0 0.0
        %858 = vmatpush1.msra.mxu0 0.0
        %859 = vmatprep.subr.mxu0 0.0
        %860 = vmatpush1.msra.mxu0 0.0
        %861 = vmatprep.subr.mxu0 0.0
        %862 = vmatpush1.msra.mxu0 0.0
        %863 = vmatprep.subr.mxu0 0.0
        %864 = vmatpush1.msra.mxu0 0.0
        %865 = vmatprep.subr.mxu0 0.0
        %866 = vmatpush1.msra.mxu0 0.0
        %867 = vmatprep.subr.mxu0 0.0
        %868 = vmatpush1.msra.mxu0 0.0
        %869 = vmatprep.subr.mxu0 0.0
        %870 = vmatpush1.msra.mxu0 0.0
        %871 = vmatprep.subr.mxu0 0.0
        %872 = vmatpush1.msra.mxu0 0.0
        %873 = vmatprep.subr.mxu0 0.0
        %874 = vmatpush1.msra.mxu0 0.0
        %875 = vmatprep.subr.mxu0 0.0
        %876 = vmatpush1.msra.mxu0 0.0
        %877 = vmatprep.subr.mxu0 0.0
        %878 = vmatpush1.msra.mxu0 0.0
        %879 = vmatprep.subr.mxu0 0.0
        %880 = vmatpush1.msra.mxu0 0.0
        %881 = vmatprep.mubr.f32.mxu0 0.0
        %882 = vmatmul.mubr.f32.gmra.mrb[0].mxu0 %v592
        %v883 = vpop.f32.mrb[0].mxu0
        %v884 = vadd.f32 0.0, %v883
        %v885 = vpop.f32.mrb[0].mxu0
        %886 = vmatprep.mubr.f32.mxu0 0.0
        %887 = vmatmul.mubr.f32.gmra.mrb[0].mxu0 %v593
        %v888 = vpop.f32.mrb[0].mxu0
        %v889 = vadd.f32 0.0, %v888
        %v890 = vpop.f32.mrb[0].mxu0
        %891 = vmatprep.mubr.f32.mxu0 0.0
        %892 = vmatmul.mubr.f32.gmra.mrb[0].mxu0 %v594
        %v893 = vpop.f32.mrb[0].mxu0
        %v894 = vadd.f32 0.0, %v893
        %v895 = vpop.f32.mrb[0].mxu0
        %896 = vmatprep.mubr.f32.mxu0 0.0
        %897 = vmatmul.mubr.f32.gmra.mrb[0].mxu0 %v595
        %v898 = vpop.f32.mrb[0].mxu0
        %v899 = vadd.f32 0.0, %v898
        %v900 = vpop.f32.mrb[0].mxu0
        %901 = vmatprep.mubr.f32.mxu0 0.0
        %902 = vmatmul.mubr.f32.gmra.mrb[0].mxu0 %v596
        %v903 = vpop.f32.mrb[0].mxu0
        %v904 = vadd.f32 0.0, %v903
        %v905 = vpop.f32.mrb[0].mxu0
        %906 = vmatprep.mubr.f32.mxu0 0.0
        %907 = vmatmul.mubr.f32.gmra.mrb[0].mxu0 %v597
        %v908 = vpop.f32.mrb[0].mxu0
        %v909 = vadd.f32 0.0, %v908
        %v910 = vpop.f32.mrb[0].mxu0
        %911 = vmatprep.mubr.f32.mxu0 0.0
        %912 = vmatmul.mubr.f32.gmra.mrb[0].mxu0 %v598
        %v913 = vpop.f32.mrb[0].mxu0
        %v914 = vadd.f32 0.0, %v913
        %v915 = vpop.f32.mrb[0].mxu0
        %916 = vmatprep.mubr.f32.mxu0 0.0
        %917 = vmatmul.mubr.f32.gmra.mrb[0].mxu0 %v599
        %v918 = vpop.f32.mrb[0].mxu0
        %v919 = vadd.f32 0.0, %v918
        %v920 = vpop.f32.mrb[0].mxu0
        %921 = vmatprep.mubr.f32.mxu0 0.0
        %922 = vmatmul.mubr.f32.gmra.mrb[0].mxu0 %v600
        %v923 = vpop.f32.mrb[0].mxu0
        %v924 = vadd.f32 0.0, %v923
        %v925 = vpop.f32.mrb[0].mxu0
        %926 = vmatprep.mubr.f32.mxu0 0.0
        %927 = vmatmul.mubr.f32.gmra.mrb[0].mxu0 %v601
        %v928 = vpop.f32.mrb[0].mxu0
        %v929 = vadd.f32 0.0, %v928
        %v930 = vpop.f32.mrb[0].mxu0
        %931 = vmatprep.mubr.f32.mxu0 0.0
        %932 = vmatmul.mubr.f32.gmra.mrb[0].mxu0 %v602
        %v933 = vpop.f32.mrb[0].mxu0
        %v934 = vadd.f32 0.0, %v933
        %v935 = vpop.f32.mrb[0].mxu0
        %936 = vmatprep.mubr.f32.mxu0 0.0
        %937 = vmatmul.mubr.f32.gmra.mrb[0].mxu0 %v603
        %v938 = vpop.f32.mrb[0].mxu0
        %v939 = vadd.f32 0.0, %v938
        %v940 = vpop.f32.mrb[0].mxu0
        %941 = vmatprep.mubr.f32.mxu0 0.0
        %942 = vmatmul.mubr.f32.gmra.mrb[0].mxu0 %v604
        %v943 = vpop.f32.mrb[0].mxu0
        %v944 = vadd.f32 0.0, %v943
        %v945 = vpop.f32.mrb[0].mxu0
        %946 = vmatprep.mubr.f32.mxu0 0.0
        %947 = vmatmul.mubr.f32.gmra.mrb[0].mxu0 %v605
        %v948 = vpop.f32.mrb[0].mxu0
        %v949 = vadd.f32 0.0, %v948
        %v950 = vpop.f32.mrb[0].mxu0
        %951 = vmatprep.mubr.f32.mxu0 0.0
        %952 = vmatmul.mubr.f32.gmra.mrb[0].mxu0 %v606
        %v953 = vpop.f32.mrb[0].mxu0
        %v954 = vadd.f32 0.0, %v953
        %v955 = vpop.f32.mrb[0].mxu0
        %956 = vmatprep.mubr.f32.mxu0 0.0
        %957 = vmatmul.mubr.f32.gmra.mrb[0].mxu0 %v607
        %v958 = vpop.f32.mrb[0].mxu0
        %v959 = vadd.f32 0.0, %v958
        %v960 = vpop.f32.mrb[0].mxu0
        %961 = vdwg.mxu0
        %v962 = vld [vmem:[%s340] sm:$0xff]
        %v963 = vld [vmem:[%s340 + $0x8] sm:$0xff]
        %v964 = vld [vmem:[%s340 + $0x10] sm:$0xff]
        %v965 = vld [vmem:[%s340 + $0x18] sm:$0xff]
        %v966 = vld [vmem:[%s340 + $0x20] sm:$0xff]
        %v967 = vld [vmem:[%s340 + $0x28] sm:$0xff]
        %v968 = vld [vmem:[%s340 + $0x30] sm:$0xff]
        %v969 = vld [vmem:[%s340 + $0x38] sm:$0xff]
        %v970 = vld [vmem:[%s340 + $0x40] sm:$0xff]
        %v971 = vld [vmem:[%s340 + $0x48] sm:$0xff]
        %v972 = vld [vmem:[%s340 + $0x50] sm:$0xff]
        %v973 = vld [vmem:[%s340 + $0x58] sm:$0xff]
        %v974 = vld [vmem:[%s340 + $0x60] sm:$0xff]
        %v975 = vld [vmem:[%s340 + $0x68] sm:$0xff]
        %v976 = vld [vmem:[%s340 + $0x70] sm:$0xff]
        %v977 = vld [vmem:[%s340 + $0x78] sm:$0xff]
        %v978 = vld [vmem:[%s4] sm:$0x7]
        %980 = vset.pattern.permute.xlu0 0
        %981 = vperm.xlu0 %980, %v962
        %v982 = vpop.permute.xlu0 %981
        %985 = vset.pattern.permute.xlu0 0
        %986 = vperm.xlu0 %985, %v963
        %v987 = vpop.permute.xlu0 %986
        %990 = vset.pattern.permute.xlu0 0
        %991 = vperm.xlu0 %990, %v964
        %v992 = vpop.permute.xlu0 %991
        %995 = vset.pattern.permute.xlu0 0
        %996 = vperm.xlu0 %995, %v965
        %v997 = vpop.permute.xlu0 %996
        %1000 = vset.pattern.permute.xlu0 0
        %1001 = vperm.xlu0 %1000, %v966
        %v1002 = vpop.permute.xlu0 %1001
        %1005 = vset.pattern.permute.xlu0 0
        %1006 = vperm.xlu0 %1005, %v967
        %v1007 = vpop.permute.xlu0 %1006
        %1010 = vset.pattern.permute.xlu0 0
        %1011 = vperm.xlu0 %1010, %v968
        %v1012 = vpop.permute.xlu0 %1011
        %1015 = vset.pattern.permute.xlu0 0
        %1016 = vperm.xlu0 %1015, %v969
        %v1017 = vpop.permute.xlu0 %1016
        %1020 = vset.pattern.permute.xlu0 0
        %1021 = vperm.xlu0 %1020, %v970
        %v1022 = vpop.permute.xlu0 %1021
        %1025 = vset.pattern.permute.xlu0 0
        %1026 = vperm.xlu0 %1025, %v971
        %v1027 = vpop.permute.xlu0 %1026
        %1030 = vset.pattern.permute.xlu0 0
        %1031 = vperm.xlu0 %1030, %v972
        %v1032 = vpop.permute.xlu0 %1031
        %1035 = vset.pattern.permute.xlu0 0
        %1036 = vperm.xlu0 %1035, %v973
        %v1037 = vpop.permute.xlu0 %1036
        %1040 = vset.pattern.permute.xlu0 0
        %1041 = vperm.xlu0 %1040, %v974
        %v1042 = vpop.permute.xlu0 %1041
        %1045 = vset.pattern.permute.xlu0 0
        %1046 = vperm.xlu0 %1045, %v975
        %v1047 = vpop.permute.xlu0 %1046
        %1050 = vset.pattern.permute.xlu0 0
        %1051 = vperm.xlu0 %1050, %v976
        %v1052 = vpop.permute.xlu0 %1051
        %1055 = vset.pattern.permute.xlu0 0
        %1056 = vperm.xlu0 %1055, %v977
        %v1057 = vpop.permute.xlu0 %1056
        %v1059 = vlaneseq
        %v1060 = vshrl.u32 %v1059, 7
        %v1061 = vsub.s32 0, %v1060
        %v1062 = vrot.slane %v978, %v1061
        %v1063 = vmul.f32 %v982, %v1062
        %v1064 = vmul.f32 %v987, %v1062
        %v1065 = vmul.f32 %v992, %v1062
        %v1066 = vmul.f32 %v997, %v1062
        %v1067 = vmul.f32 %v1002, %v1062
        %v1068 = vmul.f32 %v1007, %v1062
        %v1069 = vmul.f32 %v1012, %v1062
        %v1070 = vmul.f32 %v1017, %v1062
        %v1071 = vmul.f32 %v1022, %v1062
        %v1072 = vmul.f32 %v1027, %v1062
        %v1073 = vmul.f32 %v1032, %v1062
        %v1074 = vmul.f32 %v1037, %v1062
        %v1075 = vmul.f32 %v1042, %v1062
        %v1076 = vmul.f32 %v1047, %v1062
        %v1077 = vmul.f32 %v1052, %v1062
        %v1078 = vmul.f32 %v1057, %v1062
        %1079 = vset.pattern.permute.xlu0 1
        %1080 = vperm.xlu0 %1079, %v962
        %v1081 = vpop.permute.xlu0 %1080
        %1083 = vset.pattern.permute.xlu0 1
        %1084 = vperm.xlu0 %1083, %v963
        %v1085 = vpop.permute.xlu0 %1084
        %1087 = vset.pattern.permute.xlu0 1
        %1088 = vperm.xlu0 %1087, %v964
        %v1089 = vpop.permute.xlu0 %1088
        %1091 = vset.pattern.permute.xlu0 1
        %1092 = vperm.xlu0 %1091, %v965
        %v1093 = vpop.permute.xlu0 %1092
        %1095 = vset.pattern.permute.xlu0 1
        %1096 = vperm.xlu0 %1095, %v966
        %v1097 = vpop.permute.xlu0 %1096
        %1099 = vset.pattern.permute.xlu0 1
        %1100 = vperm.xlu0 %1099, %v967
        %v1101 = vpop.permute.xlu0 %1100
        %1103 = vset.pattern.permute.xlu0 1
        %1104 = vperm.xlu0 %1103, %v968
        %v1105 = vpop.permute.xlu0 %1104
        %1107 = vset.pattern.permute.xlu0 1
        %1108 = vperm.xlu0 %1107, %v969
        %v1109 = vpop.permute.xlu0 %1108
        %1111 = vset.pattern.permute.xlu0 1
        %1112 = vperm.xlu0 %1111, %v970
        %v1113 = vpop.permute.xlu0 %1112
        %1115 = vset.pattern.permute.xlu0 1
        %1116 = vperm.xlu0 %1115, %v971
        %v1117 = vpop.permute.xlu0 %1116
        %1119 = vset.pattern.permute.xlu0 1
        %1120 = vperm.xlu0 %1119, %v972
        %v1121 = vpop.permute.xlu0 %1120
        %1123 = vset.pattern.permute.xlu0 1
        %1124 = vperm.xlu0 %1123, %v973
        %v1125 = vpop.permute.xlu0 %1124
        %1127 = vset.pattern.permute.xlu0 1
        %1128 = vperm.xlu0 %1127, %v974
        %v1129 = vpop.permute.xlu0 %1128
        %1131 = vset.pattern.permute.xlu0 1
        %1132 = vperm.xlu0 %1131, %v975
        %v1133 = vpop.permute.xlu0 %1132
        %1135 = vset.pattern.permute.xlu0 1
        %1136 = vperm.xlu0 %1135, %v976
        %v1137 = vpop.permute.xlu0 %1136
        %1139 = vset.pattern.permute.xlu0 1
        %1140 = vperm.xlu0 %1139, %v977
        %v1141 = vpop.permute.xlu0 %1140
        %v1143 = vlaneseq
        %v1144 = vshrl.u32 %v1143, 7
        %v1145 = vsub.s32 1, %v1144
        %v1146 = vrot.slane %v978, %v1145
        %v1147 = vmul.f32 %v1081, %v1146
        %v1148 = vmul.f32 %v1085, %v1146
        %v1149 = vmul.f32 %v1089, %v1146
        %v1150 = vmul.f32 %v1093, %v1146
        %v1151 = vmul.f32 %v1097, %v1146
        %v1152 = vmul.f32 %v1101, %v1146
        %v1153 = vmul.f32 %v1105, %v1146
        %v1154 = vmul.f32 %v1109, %v1146
        %v1155 = vmul.f32 %v1113, %v1146
        %v1156 = vmul.f32 %v1117, %v1146
        %v1157 = vmul.f32 %v1121, %v1146
        %v1158 = vmul.f32 %v1125, %v1146
        %v1159 = vmul.f32 %v1129, %v1146
        %v1160 = vmul.f32 %v1133, %v1146
        %v1161 = vmul.f32 %v1137, %v1146
        %v1162 = vmul.f32 %v1141, %v1146
        %v1163 = vadd.f32 %v1063, %v1147
        %v1164 = vadd.f32 %v1064, %v1148
        %v1165 = vadd.f32 %v1065, %v1149
        %v1166 = vadd.f32 %v1066, %v1150
        %v1167 = vadd.f32 %v1067, %v1151
        %v1168 = vadd.f32 %v1068, %v1152
        %v1169 = vadd.f32 %v1069, %v1153
        %v1170 = vadd.f32 %v1070, %v1154
        %v1171 = vadd.f32 %v1071, %v1155
        %v1172 = vadd.f32 %v1072, %v1156
        %v1173 = vadd.f32 %v1073, %v1157
        %v1174 = vadd.f32 %v1074, %v1158
        %v1175 = vadd.f32 %v1075, %v1159
        %v1176 = vadd.f32 %v1076, %v1160
        %v1177 = vadd.f32 %v1077, %v1161
        %v1178 = vadd.f32 %v1078, %v1162
        %1179 = vset.pattern.permute.xlu0 2
        %1180 = vperm.xlu0 %1179, %v962
        %v1181 = vpop.permute.xlu0 %1180
        %1183 = vset.pattern.permute.xlu0 2
        %1184 = vperm.xlu0 %1183, %v963
        %v1185 = vpop.permute.xlu0 %1184
        %1187 = vset.pattern.permute.xlu0 2
        %1188 = vperm.xlu0 %1187, %v964
        %v1189 = vpop.permute.xlu0 %1188
        %1191 = vset.pattern.permute.xlu0 2
        %1192 = vperm.xlu0 %1191, %v965
        %v1193 = vpop.permute.xlu0 %1192
        %1195 = vset.pattern.permute.xlu0 2
        %1196 = vperm.xlu0 %1195, %v966
        %v1197 = vpop.permute.xlu0 %1196
        %1199 = vset.pattern.permute.xlu0 2
        %1200 = vperm.xlu0 %1199, %v967
        %v1201 = vpop.permute.xlu0 %1200
        %1203 = vset.pattern.permute.xlu0 2
        %1204 = vperm.xlu0 %1203, %v968
        %v1205 = vpop.permute.xlu0 %1204
        %1207 = vset.pattern.permute.xlu0 2
        %1208 = vperm.xlu0 %1207, %v969
        %v1209 = vpop.permute.xlu0 %1208
        %1211 = vset.pattern.permute.xlu0 2
        %1212 = vperm.xlu0 %1211, %v970
        %v1213 = vpop.permute.xlu0 %1212
        %1215 = vset.pattern.permute.xlu0 2
        %1216 = vperm.xlu0 %1215, %v971
        %v1217 = vpop.permute.xlu0 %1216
        %1219 = vset.pattern.permute.xlu0 2
        %1220 = vperm.xlu0 %1219, %v972
        %v1221 = vpop.permute.xlu0 %1220
        %1223 = vset.pattern.permute.xlu0 2
        %1224 = vperm.xlu0 %1223, %v973
        %v1225 = vpop.permute.xlu0 %1224
        %1227 = vset.pattern.permute.xlu0 2
        %1228 = vperm.xlu0 %1227, %v974
        %v1229 = vpop.permute.xlu0 %1228
        %1231 = vset.pattern.permute.xlu0 2
        %1232 = vperm.xlu0 %1231, %v975
        %v1233 = vpop.permute.xlu0 %1232
        %1235 = vset.pattern.permute.xlu0 2
        %1236 = vperm.xlu0 %1235, %v976
        %v1237 = vpop.permute.xlu0 %1236
        %1239 = vset.pattern.permute.xlu0 2
        %1240 = vperm.xlu0 %1239, %v977
        %v1241 = vpop.permute.xlu0 %1240
        %v1243 = vlaneseq
        %v1244 = vshrl.u32 %v1243, 7
        %v1245 = vsub.s32 2, %v1244
        %v1246 = vrot.slane %v978, %v1245
        %v1247 = vmul.f32 %v1181, %v1246
        %v1248 = vmul.f32 %v1185, %v1246
        %v1249 = vmul.f32 %v1189, %v1246
        %v1250 = vmul.f32 %v1193, %v1246
        %v1251 = vmul.f32 %v1197, %v1246
        %v1252 = vmul.f32 %v1201, %v1246
        %v1253 = vmul.f32 %v1205, %v1246
        %v1254 = vmul.f32 %v1209, %v1246
        %v1255 = vmul.f32 %v1213, %v1246
        %v1256 = vmul.f32 %v1217, %v1246
        %v1257 = vmul.f32 %v1221, %v1246
        %v1258 = vmul.f32 %v1225, %v1246
        %v1259 = vmul.f32 %v1229, %v1246
        %v1260 = vmul.f32 %v1233, %v1246
        %v1261 = vmul.f32 %v1237, %v1246
        %v1262 = vmul.f32 %v1241, %v1246
        %v1263 = vadd.f32 %v1163, %v1247
        %v1264 = vadd.f32 %v1164, %v1248
        %v1265 = vadd.f32 %v1165, %v1249
        %v1266 = vadd.f32 %v1166, %v1250
        %v1267 = vadd.f32 %v1167, %v1251
        %v1268 = vadd.f32 %v1168, %v1252
        %v1269 = vadd.f32 %v1169, %v1253
        %v1270 = vadd.f32 %v1170, %v1254
        %v1271 = vadd.f32 %v1171, %v1255
        %v1272 = vadd.f32 %v1172, %v1256
        %v1273 = vadd.f32 %v1173, %v1257
        %v1274 = vadd.f32 %v1174, %v1258
        %v1275 = vadd.f32 %v1175, %v1259
        %v1276 = vadd.f32 %v1176, %v1260
        %v1277 = vadd.f32 %v1177, %v1261
        %v1278 = vadd.f32 %v1178, %v1262
        %1279 = vst [vmem:[%s322] sm:$0xff] %v723
        %1280 = vst [vmem:[%s322 + $0x18] sm:$0xff] %v729
        %1281 = vst [vmem:[%s322 + $0x30] sm:$0xff] %v735
        %1282 = vst [vmem:[%s322 + $0x48] sm:$0xff] %v741
        %1283 = vst [vmem:[%s322 + $0x60] sm:$0xff] %v747
        %1284 = vst [vmem:[%s322 + $0x78] sm:$0xff] %v753
        %1285 = vst [vmem:[%s322 + $0x90] sm:$0xff] %v759
        %1286 = vst [vmem:[%s322 + $0xa8] sm:$0xff] %v765
        %1287 = vst [vmem:[%s322 + $0xc0] sm:$0xff] %v771
        %1288 = vst [vmem:[%s322 + $0xd8] sm:$0xff] %v777
        %1289 = vst [vmem:[%s322 + $0xf0] sm:$0xff] %v783
        %1290 = vst [vmem:[%s322 + $0x108] sm:$0xff] %v789
        %1291 = vst [vmem:[%s322 + $0x120] sm:$0xff] %v795
        %1292 = vst [vmem:[%s322 + $0x138] sm:$0xff] %v801
        %1293 = vst [vmem:[%s322 + $0x150] sm:$0xff] %v807
        %1294 = vst [vmem:[%s322 + $0x168] sm:$0xff] %v813
        %1295 = vst [vmem:[%s322 + $0x8] sm:$0xff] %v725
        %1296 = vst [vmem:[%s322 + $0x20] sm:$0xff] %v731
        %1297 = vst [vmem:[%s322 + $0x38] sm:$0xff] %v737
        %1298 = vst [vmem:[%s322 + $0x50] sm:$0xff] %v743
        %1299 = vst [vmem:[%s322 + $0x68] sm:$0xff] %v749
        %1300 = vst [vmem:[%s322 + $0x80] sm:$0xff] %v755
        %1301 = vst [vmem:[%s322 + $0x98] sm:$0xff] %v761
        %1302 = vst [vmem:[%s322 + $0xb0] sm:$0xff] %v767
        %1303 = vst [vmem:[%s322 + $0xc8] sm:$0xff] %v773
        %1304 = vst [vmem:[%s322 + $0xe0] sm:$0xff] %v779
        %1305 = vst [vmem:[%s322 + $0xf8] sm:$0xff] %v785
        %1306 = vst [vmem:[%s322 + $0x110] sm:$0xff] %v791
        %1307 = vst [vmem:[%s322 + $0x128] sm:$0xff] %v797
        %1308 = vst [vmem:[%s322 + $0x140] sm:$0xff] %v803
        %1309 = vst [vmem:[%s322 + $0x158] sm:$0xff] %v809
        %1310 = vst [vmem:[%s322 + $0x170] sm:$0xff] %v815
        %1311 = vst [vmem:[%s322 + $0x10] sm:$0xff] %v1263
        %1312 = vst [vmem:[%s322 + $0x28] sm:$0xff] %v1264
        %1313 = vst [vmem:[%s322 + $0x40] sm:$0xff] %v1265
        %1314 = vst [vmem:[%s322 + $0x58] sm:$0xff] %v1266
        %1315 = vst [vmem:[%s322 + $0x70] sm:$0xff] %v1267
        %1316 = vst [vmem:[%s322 + $0x88] sm:$0xff] %v1268
        %1317 = vst [vmem:[%s322 + $0xa0] sm:$0xff] %v1269
        %1318 = vst [vmem:[%s322 + $0xb8] sm:$0xff] %v1270
        %1319 = vst [vmem:[%s322 + $0xd0] sm:$0xff] %v1271
        %1320 = vst [vmem:[%s322 + $0xe8] sm:$0xff] %v1272
        %1321 = vst [vmem:[%s322 + $0x100] sm:$0xff] %v1273
        %1322 = vst [vmem:[%s322 + $0x118] sm:$0xff] %v1274
        %1323 = vst [vmem:[%s322 + $0x130] sm:$0xff] %v1275
        %1324 = vst [vmem:[%s322 + $0x148] sm:$0xff] %v1276
        %1325 = vst [vmem:[%s322 + $0x160] sm:$0xff] %v1277
        %1326 = vst [vmem:[%s322 + $0x178] sm:$0xff] %v1278
        %1327 = vst [vmem:[%s329] sm:$0xff] %v884
        %1328 = vst [vmem:[%s329 + $0x10] sm:$0xff] %v889
        %1329 = vst [vmem:[%s329 + $0x20] sm:$0xff] %v894
        %1330 = vst [vmem:[%s329 + $0x30] sm:$0xff] %v899
        %1331 = vst [vmem:[%s329 + $0x40] sm:$0xff] %v904
        %1332 = vst [vmem:[%s329 + $0x50] sm:$0xff] %v909
        %1333 = vst [vmem:[%s329 + $0x60] sm:$0xff] %v914
        %1334 = vst [vmem:[%s329 + $0x70] sm:$0xff] %v919
        %1335 = vst [vmem:[%s329 + $0x80] sm:$0xff] %v924
        %1336 = vst [vmem:[%s329 + $0x90] sm:$0xff] %v929
        %1337 = vst [vmem:[%s329 + $0xa0] sm:$0xff] %v934
        %1338 = vst [vmem:[%s329 + $0xb0] sm:$0xff] %v939
        %1339 = vst [vmem:[%s329 + $0xc0] sm:$0xff] %v944
        %1340 = vst [vmem:[%s329 + $0xd0] sm:$0xff] %v949
        %1341 = vst [vmem:[%s329 + $0xe0] sm:$0xff] %v954
        %1342 = vst [vmem:[%s329 + $0xf0] sm:$0xff] %v959
        %1343 = vst [vmem:[%s329 + $0x8] sm:$0xff] %v1263
        %1344 = vst [vmem:[%s329 + $0x18] sm:$0xff] %v1264
        %1345 = vst [vmem:[%s329 + $0x28] sm:$0xff] %v1265
        %1346 = vst [vmem:[%s329 + $0x38] sm:$0xff] %v1266
        %1347 = vst [vmem:[%s329 + $0x48] sm:$0xff] %v1267
        %1348 = vst [vmem:[%s329 + $0x58] sm:$0xff] %v1268
        %1349 = vst [vmem:[%s329 + $0x68] sm:$0xff] %v1269
        %1350 = vst [vmem:[%s329 + $0x78] sm:$0xff] %v1270
        %1351 = vst [vmem:[%s329 + $0x88] sm:$0xff] %v1271
        %1352 = vst [vmem:[%s329 + $0x98] sm:$0xff] %v1272
        %1353 = vst [vmem:[%s329 + $0xa8] sm:$0xff] %v1273
        %1354 = vst [vmem:[%s329 + $0xb8] sm:$0xff] %v1274
        %1355 = vst [vmem:[%s329 + $0xc8] sm:$0xff] %v1275
        %1356 = vst [vmem:[%s329 + $0xd8] sm:$0xff] %v1276
        %1357 = vst [vmem:[%s329 + $0xe8] sm:$0xff] %v1277
        %1358 = vst [vmem:[%s329 + $0xf8] sm:$0xff] %v1278
        %s1359 = sand.u32 %s171, 1
        %s1360 = scalar_lea.sflag [#allocation4], %s1359
        %s1361 = sand.u32 %s171, 1
        %s1362 = smul.addr %s1361, 384
        %s1363 = scalar_lea.vmem [#allocation7], %s1362
        %s1364 = sand.u32 %s197, 1
        %s1365 = scalar_lea.sflag [#allocation9], %s1364
        %s1366 = sand.u32 %s197, 1
        %s1367 = smul.addr %s1366, 256
        %s1368 = scalar_lea.vmem [#allocation8], %s1367
        // Predicated region
        $region53: #{tpu_custom_call.1} parent=43 // pred_check
          %p1369 = pneg %p181
        $region54: #{tpu_custom_call.1} parent=43 // pred_check_branch
          %1371 = sbr.rel (%p1369) target = $region56
        $region55: #{tpu_custom_call.1} parent=43 // pred_region
          %s1372 = smul.u32 16, %s27
          %s1374 = ssub.s32 6144, 6144
          %1375 = vsyncadd %s1360, %s1374
          %s1376 = smul.addr %s1372, 3
          %s1377 = smul.addr %s1376, 128
          %s1378 = scalar_lea.hbm %s6, %s1377
          %s1379 = sshll.u32 %s1363, 4
          %s1380 = int_to_ptr.vmem [resolvable:$true] %s1379
          %1385 = dma.vmem_to_hbm [thread:$0]  %s1380, 6144, %s1378, %s1360, 384, 384, 24
        $region56: #{tpu_custom_call.1} parent=43 // pred_fallthru
          _
        // Predicated region
        $region57: #{tpu_custom_call.1} parent=43 // pred_check
          %p1386 = pneg %p207
        $region58: #{tpu_custom_call.1} parent=43 // pred_check_branch
          %1388 = sbr.rel (%p1386) target = $region60
        $region59: #{tpu_custom_call.1} parent=43 // pred_region
          %s1389 = smul.u32 16, %s27
          %s1391 = ssub.s32 4096, 4096
          %1392 = vsyncadd %s1365, %s1391
          %s1393 = smul.addr %s1389, 2
          %s1394 = smul.addr %s1393, 128
          %s1395 = scalar_lea.hbm %s7, %s1394
          %s1396 = sshll.u32 %s1368, 4
          %s1397 = int_to_ptr.vmem [resolvable:$true] %s1396
          %1402 = dma.vmem_to_hbm [thread:$0]  %s1397, 4096, %s1395, %s1365, 256, 256, 16
        $region60: #{tpu_custom_call.1} parent=43 // pred_fallthru
          _
      $region44: #{tpu_custom_call.1} parent=5 // pred_fallthru
        _
      %p1403 = scmp.le.s32.totalorder 2, %s22
      // Predicated region
      $region61: #{tpu_custom_call.1} parent=5 // pred_check
        %p1404 = pneg %p1403
      $region62: #{tpu_custom_call.1} parent=5 // pred_check_branch
        %1406 = sbr.rel (%p1404) target = $region64
      $region63: #{tpu_custom_call.1} parent=5 // pred_region
        %s1407 = ssub.s32 %s22, 2
        // Predicated region
        $region65: #{tpu_custom_call.1} parent=63 // pred_check
          %p1408 = pneg %p187
        $region66: #{tpu_custom_call.1} parent=63 // pred_check_branch
          %1410 = sbr.rel (%p1408) target = $region68
        $region67: #{tpu_custom_call.1} parent=63 // pred_region
          %s1411 = sand.u32 %s172, 1
          %s1412 = scalar_lea.sflag [#allocation4], %s1411
          %s1413 = sand.u32 %s172, 1
          %s1414 = smul.addr %s1413, 384
          %s1415 = scalar_lea.vmem [#allocation7], %s1414
          %1416 = dma.done %s1412, 6144
        $region68: #{tpu_custom_call.1} parent=63 // pred_fallthru
          _
        // Predicated region
        $region69: #{tpu_custom_call.1} parent=63 // pred_check
          %p1417 = pneg %p213
        $region70: #{tpu_custom_call.1} parent=63 // pred_check_branch
          %1419 = sbr.rel (%p1417) target = $region72
        $region71: #{tpu_custom_call.1} parent=63 // pred_region
          %s1420 = sand.u32 %s198, 1
          %s1421 = scalar_lea.sflag [#allocation9], %s1420
          %s1422 = sand.u32 %s198, 1
          %s1423 = smul.addr %s1422, 256
          %s1424 = scalar_lea.vmem [#allocation8], %s1423
          %1425 = dma.done %s1421, 4096
        $region72: #{tpu_custom_call.1} parent=63 // pred_fallthru
          _
      $region64: #{tpu_custom_call.1} parent=5 // pred_fallthru
        _
    $region6: #{tpu_custom_call.1} parent=1 // loop_footer
      %s26 = sadd.s32 1, %s22
    $region7: #{tpu_custom_call.1} parent=1 // loop_footer_branch
      %21 = sbr.rel target = $region3
    $region8: #{tpu_custom_call.1} parent=1 // loop_exit
      _
    %1426 = vsyncpa [#allocation3], 1
    %s1427 = scalar_lea.sflag [#allocation3], 1
    %1428 = vsyncpa %s1427, 1
    %1429 = vsyncpa [#allocation6], 1
    %1430 = vsyncpa [#allocation4], 1
    %s1431 = scalar_lea.sflag [#allocation4], 1
    %1432 = vsyncpa %s1431, 1
    %1433 = vsyncpa [#allocation9], 1
    %s1434 = scalar_lea.sflag [#allocation9], 1
    %1435 = vsyncpa %s1434, 1

</llo_original>
